<compile_context>
chip_gen: v5e
topology: v5e:2x2
jax: 0.10.0
libtpu: 0.0.40
codegen_flags: <defaults>
</compile_context>

<pallas_src>
import functools

import jax
import jax.numpy as jnp
from jax.experimental import pallas as pl
from jax.experimental.pallas import tpu as pltpu


def _rms_norm(x, w, eps):
    # x: (S, H) fp32, w: (1, H) fp32
    var = jnp.mean(x * x, axis=-1, keepdims=True)
    return (x * jax.lax.rsqrt(var + eps)) * w


def _rotate_half(x, half):
    # last dim of x is exactly head_dim here -> textbook rotate_half, no cross-head leakage.
    return jnp.concatenate([-x[:, half:], x[:, :half]], axis=-1)


def transformer_layer_kernel(
    x_ref, cos_ref, sin_ref,
    wqkv_ref, wo_ref, n1_ref, n2_ref,
    wux_ref, wug_ref, wdn_ref,
    out_ref,
    h2_ref,                        # VMEM scratch (S, H) bf16: norm2 output, reused across FFN tiles
    *, num_heads, kv_heads, head_dim, eps,
):
    j = pl.program_id(1)           # FFN-tile axis (innermost, "arbitrary")
    S = x_ref.shape[1]
    H = x_ref.shape[2]
    d = head_dim
    half = d // 2
    kvd = kv_heads * d
    g = num_heads // kv_heads      # GQA group size

    # ---------------- step j == 0: norm1 -> RoPE GQA attention -> residual -> norm2 ----------------
    @pl.when(j == 0)
    def _():
        x = x_ref[0]                                          # (S, H) fp32
        h = _rms_norm(x, n1_ref[...], eps)

        # fused QKV projection: bf16 operands, fp32 MXU accumulation
        qkv = jnp.dot(h.astype(jnp.bfloat16), wqkv_ref[...],
                      preferred_element_type=jnp.float32)     # (S, H + 2*kvd)
        q_all = qkv[:, :H]
        k_all = qkv[:, H:H + kvd]
        v_all = qkv[:, H + kvd:]

        # (S, head_dim) RoPE tables; per-group broadcast is done in-kernel (cheap, hoisted).
        cos = cos_ref[...]
        sin = sin_ref[...]
        cos_g = jnp.concatenate([cos] * g, axis=0)            # (g*S, d)
        sin_g = jnp.concatenate([sin] * g, axis=0)

        scale = 1.0 / (d ** 0.5)
        row = jax.lax.broadcasted_iota(jnp.int32, (S, S), 0)
        col = jax.lax.broadcasted_iota(jnp.int32, (S, S), 1)
        row_g = jnp.concatenate([row] * g, axis=0)            # (g*S, S)
        col_g = jnp.concatenate([col] * g, axis=0)
        causal = col_g <= row_g
        neg_inf = jnp.float32(-1e30)

        # residual accumulator; per-group attention output is folded straight into x + o @ Wo
        acc = x

        for kv in range(kv_heads):
            # ---- K / V for this KV head (fp32 RoPE on K, matching apply_rotary_fp32) ----
            k_h = k_all[:, kv * d:(kv + 1) * d]               # (S, d)
            v_h = v_all[:, kv * d:(kv + 1) * d]
            k_h = k_h * cos + _rotate_half(k_h, half) * sin
            k_bf = k_h.astype(jnp.bfloat16)
            v_bf = v_h.astype(jnp.bfloat16)

            # ---- stack the g query heads of this group on the M dimension ----
            q_grp = jnp.concatenate(
                [q_all[:, (kv * g + i) * d:(kv * g + i + 1) * d] for i in range(g)],
                axis=0)                                       # (g*S, d)
            q_grp = q_grp * cos_g + _rotate_half(q_grp, half) * sin_g
            q_bf = q_grp.astype(jnp.bfloat16)

            # scores: contract last dims, no explicit transpose
            s = jax.lax.dot_general(q_bf, k_bf, (((1,), (1,)), ((), ())),
                                    preferred_element_type=jnp.float32) * scale
            s = jnp.where(causal, s, neg_inf)
            m = jnp.max(s, axis=-1, keepdims=True)
            p = jnp.exp(s - m)                                # unnormalized softmax (fp32)
            l = jnp.sum(p, axis=-1, keepdims=True)
            o = jnp.dot(p.astype(jnp.bfloat16), v_bf,
                        preferred_element_type=jnp.float32)   # (g*S, d)
            o = o * pl.reciprocal(l, approx=True)             # normalize after PV (smaller tile)

            # back to (S, g*d) and fold into the Wo projection for this group's rows
            o_cat = jnp.concatenate([o[i * S:(i + 1) * S, :] for i in range(g)], axis=1)
            acc = acc + jnp.dot(o_cat.astype(jnp.bfloat16),
                                wo_ref[kv * g * d:(kv + 1) * g * d, :],
                                preferred_element_type=jnp.float32)

        out_ref[0] = acc                                      # x1 = x + attention (fp32)
        h2_ref[...] = _rms_norm(acc, n2_ref[...], eps).astype(jnp.bfloat16)

    # ---------------- every step: GLU for FFN tile j, accumulated into the output block ----------------
    h2 = h2_ref[...]                                          # (S, H) bf16
    xu = jnp.dot(h2, wux_ref[...], preferred_element_type=jnp.float32)   # (S, ffn_tile)
    gg = jnp.dot(h2, wug_ref[...], preferred_element_type=jnp.float32)
    hmlp = (xu * (gg * jax.nn.sigmoid(gg))).astype(jnp.bfloat16)         # silu(g) * x
    out_ref[0] += jnp.dot(hmlp, wdn_ref[...], preferred_element_type=jnp.float32)


def _invariant_spec(shape, index_map):
    # Grid-invariant operand: single-buffered (its block index never changes, so default
    # double-buffering would only double its VMEM footprint for zero overlap benefit).
    try:
        return pl.BlockSpec(shape, index_map, pipeline_mode=pl.Buffered(1))
    except TypeError:  # older jax without pipeline_mode on BlockSpec
        return pl.BlockSpec(shape, index_map)


def prepare_params(params):
    """One-time weight prep (fusion + bf16 cast). Keep OUT of the per-call path so weights are not
    re-read/re-written in HBM on every forward call."""
    return {
        "w_qkv": jnp.concatenate([params["wq"], params["wk"], params["wv"]],
                                 axis=1).astype(jnp.bfloat16),       # (H, H + 2*kvd)
        "w_o": params["wo"].astype(jnp.bfloat16),                    # (H, H)
        "w_ux": params["wux"].astype(jnp.bfloat16),                  # (H, ffn)
        "w_ug": params["wug"].astype(jnp.bfloat16),                  # (H, ffn)
        "w_dn": params["wdn"].astype(jnp.bfloat16),                  # (ffn, H)
        "n1": params["n1"].astype(jnp.float32),                      # (1, H)
        "n2": params["n2"].astype(jnp.float32),                      # (1, H)
    }


def transformer_layer(x, cos, sin, prepared, *, num_heads, kv_heads, eps, ffn_block=2048):
    B, S, H = x.shape
    head_dim = H // num_heads
    kvd = kv_heads * head_dim
    ffn = prepared["w_ux"].shape[1]

    # FFN N-tiling: stream (H, ffn_tile)/(ffn_tile, H) weight tiles along an inner "arbitrary" axis.
    ffn_tile = ffn_block if (ffn % ffn_block == 0) else ffn
    n_ffn = ffn // ffn_tile

    kernel = functools.partial(
        transformer_layer_kernel,
        num_heads=num_heads, kv_heads=kv_heads, head_dim=head_dim, eps=eps)

    def inv(shape):
        nd = len(shape)
        return _invariant_spec(shape, lambda b, j, _nd=nd: (0,) * _nd)

    in_specs = [
        pl.BlockSpec((1, S, H), lambda b, j: (b, 0, 0)),        # x: one batch row per outer step
        inv((S, head_dim)), inv((S, head_dim)),                 # cos, sin (no wrapper-side tiling)
        inv((H, H + 2 * kvd)),                                  # fused Wq|Wk|Wv (bf16, Buffered(1))
        inv((H, H)),                                            # Wo (bf16, Buffered(1))
        inv((1, H)), inv((1, H)),                               # norm1 / norm2 weights
        pl.BlockSpec((H, ffn_tile), lambda b, j: (0, j)),       # up_x tile (streamed, double-buffered)
        pl.BlockSpec((H, ffn_tile), lambda b, j: (0, j)),       # up_g tile
        pl.BlockSpec((ffn_tile, H), lambda b, j: (j, 0)),       # down tile
    ]

    # Explicit scoped-VMEM budget sized from the tile plan (with headroom), instead of the default.
    def nb(shape, dt):
        n = 1
        for s in shape:
            n *= int(s)
        return n * jnp.dtype(dt).itemsize

    resident = (2 * nb((S, head_dim), jnp.float32)                      # cos, sin
                + nb((H, H + 2 * kvd), jnp.bfloat16)                    # Wqkv
                + nb((H, H), jnp.bfloat16)                              # Wo
                + 2 * nb((1, H), jnp.float32)                           # norm weights
                + nb((S, H), jnp.bfloat16))                             # h2 scratch
    streamed = 2 * (2 * nb((1, S, H), jnp.float32)                      # x + out (double-buffered)
                    + 2 * nb((H, ffn_tile), jnp.bfloat16)               # up_x/up_g tiles
                    + nb((ffn_tile, H), jnp.bfloat16))                  # down tile
    vmem_limit = int(min(max(4 * (resident + streamed), 16 << 20), 48 << 20))

    return pl.pallas_call(
        kernel,
        out_shape=jax.ShapeDtypeStruct((B, S, H), jnp.float32),
        grid=(B, n_ffn),
        in_specs=in_specs,
        out_specs=pl.BlockSpec((1, S, H), lambda b, j: (b, 0, 0)),
        scratch_shapes=[pltpu.VMEM((S, H), jnp.bfloat16)],              # norm2 output across FFN tiles
        compiler_params=pltpu.CompilerParams(
            dimension_semantics=("parallel", "arbitrary"),
            vmem_limit_bytes=vmem_limit),
    )(x, cos, sin, prepared["w_qkv"], prepared["w_o"], prepared["n1"],
      prepared["n2"], prepared["w_ux"], prepared["w_ug"], prepared["w_dn"])


# ---------------- pure-JAX fp32 reference (for sanity check) ----------------
def reference_layer(x, cos, sin, params, *, num_heads, kv_heads, eps):
    B, S, H = x.shape
    hd = H // num_heads
    groups = num_heads // kv_heads

    def rms(v, w):
        var = jnp.mean(v * v, axis=-1, keepdims=True)
        return v * jax.lax.rsqrt(var + eps) * w[0]

    h = rms(x, params["n1"])
    q = h @ params["wq"]
    k = h @ params["wk"]
    v = h @ params["wv"]
    q = q.reshape(B, S, num_heads, hd).transpose(0, 2, 1, 3)
    k = k.reshape(B, S, kv_heads, hd).transpose(0, 2, 1, 3)
    v = v.reshape(B, S, kv_heads, hd).transpose(0, 2, 1, 3)

    def rot_half(t):
        t1, t2 = jnp.split(t, 2, axis=-1)
        return jnp.concatenate([-t2, t1], axis=-1)

    q = q * cos + rot_half(q) * sin
    k = k * cos + rot_half(k) * sin
    k = jnp.repeat(k, groups, axis=1)
    v = jnp.repeat(v, groups, axis=1)

    s = jnp.einsum("bhqd,bhkd->bhqk", q, k) / jnp.sqrt(jnp.float32(hd))
    mask = jnp.tril(jnp.ones((S, S), dtype=bool))
    s = jnp.where(mask, s, -1e30)
    p = jax.nn.softmax(s, axis=-1)
    o = jnp.einsum("bhqk,bhkd->bhqd", p, v)
    o = o.transpose(0, 2, 1, 3).reshape(B, S, H) @ params["wo"]

    x1 = x + o
    h2 = rms(x1, params["n2"])
    xu = h2 @ params["wux"]
    gg = h2 @ params["wug"]
    down = (jax.nn.silu(gg) * xu) @ params["wdn"]
    return x1 + down


if __name__ == "__main__":
    # Small config consistent with the module (correctness validation only at this shape).
    B, S, H = 2, 8, 32
    num_heads, kv_heads = 4, 2
    head_dim = H // num_heads
    ffn_dim = 64
    num_layers = 2
    eps = 1e-5
    std = 0.02
    std_o = std / (2 * num_layers) ** 0.5

    key = jax.random.PRNGKey(0)
    ks = jax.random.split(key, 10)

    params = {
        "wq": std * jax.random.normal(ks[0], (H, H), jnp.float32),
        "wk": std * jax.random.normal(ks[1], (H, kv_heads * head_dim), jnp.float32),
        "wv": std * jax.random.normal(ks[2], (H, kv_heads * head_dim), jnp.float32),
        "wo": std_o * jax.random.normal(ks[3], (H, H), jnp.float32),
        "wux": std * jax.random.normal(ks[4], (H, ffn_dim), jnp.float32),
        "wug": std * jax.random.normal(ks[5], (H, ffn_dim), jnp.float32),
        "wdn": std_o * jax.random.normal(ks[6], (ffn_dim, H), jnp.float32),
        "n1": jnp.ones((1, H), jnp.float32),
        "n2": jnp.ones((1, H), jnp.float32),
    }

    x = jax.random.normal(ks[7], (B, S, H), jnp.float32)

    # RoPE tables: (S, head_dim)
    inv_freq = 1.0 / (10000.0 ** (jnp.arange(0, head_dim, 2, dtype=jnp.float32) / head_dim))
    pos = jnp.arange(S, dtype=jnp.float32)
    freqs = jnp.outer(pos, inv_freq)                   # (S, head_dim/2)
    emb = jnp.concatenate([freqs, freqs], axis=-1)     # (S, head_dim)
    cos, sin = jnp.cos(emb), jnp.sin(emb)

    prepared = prepare_params(params)                  # one-time weight fusion + bf16 cast

    out = transformer_layer(x, cos, sin, prepared,
                            num_heads=num_heads, kv_heads=kv_heads, eps=eps)
    out = jax.block_until_ready(out)

    ref = reference_layer(x, cos, sin, params,
                          num_heads=num_heads, kv_heads=kv_heads, eps=eps)
    assert out.shape == (B, S, H)
    assert jnp.allclose(out, ref, atol=1e-2, rtol=1e-2), "mismatch vs JAX reference"

    print("KERNEL_OK")
</pallas_src>

<mosaic_0001>
module attributes {stable_mosaic.version = 11 : i64} {
  func.func @transformer_layer_kernel(%arg0: i32, %arg1: i32, %arg2: memref<1x8x32xf32, #tpu.memory_space<vmem>>, %arg3: memref<8x8xf32, #tpu.memory_space<vmem>>, %arg4: memref<8x8xf32, #tpu.memory_space<vmem>>, %arg5: memref<32x64xbf16, #tpu.memory_space<vmem>>, %arg6: memref<32x32xbf16, #tpu.memory_space<vmem>>, %arg7: memref<1x32xf32, #tpu.memory_space<vmem>>, %arg8: memref<1x32xf32, #tpu.memory_space<vmem>>, %arg9: memref<32x64xbf16, #tpu.memory_space<vmem>>, %arg10: memref<32x64xbf16, #tpu.memory_space<vmem>>, %arg11: memref<64x32xbf16, #tpu.memory_space<vmem>>, %arg12: memref<1x8x32xf32, #tpu.memory_space<vmem>>, %arg13: memref<8x32xbf16, #tpu.memory_space<vmem>>) attributes {dimension_semantics = [#tpu.dimension_semantics<parallel>, #tpu.dimension_semantics<arbitrary>], iteration_bounds = array<i64: 2, 1>, scalar_prefetch = 0 : i64, scratch_operands = 1 : i64, tpu.core_type = #tpu.core_type<tc>, window_params = [{transform_indices = @transform_0, window_bounds = array<i64: 1, 8, 32>}, {pipeline_mode = #tpu.pipeline_mode<synchronous>, transform_indices = @transform_1, window_bounds = array<i64: 8, 8>}, {pipeline_mode = #tpu.pipeline_mode<synchronous>, transform_indices = @transform_2, window_bounds = array<i64: 8, 8>}, {pipeline_mode = #tpu.pipeline_mode<synchronous>, transform_indices = @transform_3, window_bounds = array<i64: 32, 64>}, {pipeline_mode = #tpu.pipeline_mode<synchronous>, transform_indices = @transform_4, window_bounds = array<i64: 32, 32>}, {pipeline_mode = #tpu.pipeline_mode<synchronous>, transform_indices = @transform_5, window_bounds = array<i64: 1, 32>}, {pipeline_mode = #tpu.pipeline_mode<synchronous>, transform_indices = @transform_6, window_bounds = array<i64: 1, 32>}, {transform_indices = @transform_7, window_bounds = array<i64: 32, 64>}, {transform_indices = @transform_8, window_bounds = array<i64: 32, 64>}, {transform_indices = @transform_9, window_bounds = array<i64: 64, 32>}, {transform_indices = @transform_10, window_bounds = array<i64: 1, 8, 32>}]} {
    %c0_i32 = arith.constant 0 : i32
    %0 = arith.cmpi eq, %arg1, %c0_i32 : i32
    %1 = arith.extui %0 : i1 to i32
    %c0_i32_0 = arith.constant 0 : i32
    %2 = arith.cmpi ne, %1, %c0_i32_0 : i32
    scf.if %2 {
      %c0_17 = arith.constant 0 : index
      %c0_18 = arith.constant 0 : index
      %c0_19 = arith.constant 0 : index
      %24 = vector.load %arg2[%c0_17, %c0_18, %c0_19] : memref<1x8x32xf32, #tpu.memory_space<vmem>>, vector<1x8x32xf32>
      %25 = vector.shape_cast %24 : vector<1x8x32xf32> to vector<8x32xf32>
      %c0_20 = arith.constant 0 : index
      %c0_21 = arith.constant 0 : index
      %26 = vector.load %arg7[%c0_20, %c0_21] : memref<1x32xf32, #tpu.memory_space<vmem>>, vector<1x32xf32>
      %27 = arith.mulf %25, %25 : vector<8x32xf32>
      %cst_22 = arith.constant dense<0.000000e+00> : vector<8xf32>
      %28 = vector.multi_reduction <add>, %27, %cst_22 [1] : vector<8x32xf32> to vector<8xf32>
      %29 = vector.shape_cast %28 : vector<8xf32> to vector<8x1xf32>
      %cst_23 = arith.constant 3.200000e+01 : f32
      %30 = vector.broadcast %cst_23 : f32 to vector<8x1xf32>
      %31 = arith.divf %29, %30 : vector<8x1xf32>
      %cst_24 = arith.constant 9.99999974E-6 : f32
      %32 = vector.broadcast %cst_24 : f32 to vector<8x1xf32>
      %33 = arith.addf %31, %32 : vector<8x1xf32>
      %34 = math.rsqrt %33 : vector<8x1xf32>
      %35 = vector.broadcast %34 : vector<8x1xf32> to vector<8x32xf32>
      %36 = arith.mulf %25, %35 : vector<8x32xf32>
      %37 = vector.broadcast %26 : vector<1x32xf32> to vector<8x32xf32>
      %38 = arith.mulf %36, %37 : vector<8x32xf32>
      %39 = arith.truncf %38 : vector<8x32xf32> to vector<8x32xbf16>
      %c0_25 = arith.constant 0 : index
      %c0_26 = arith.constant 0 : index
      %40 = vector.load %arg5[%c0_25, %c0_26] : memref<32x64xbf16, #tpu.memory_space<vmem>>, vector<32x64xbf16>
      %cst_27 = arith.constant dense<0.000000e+00> : vector<8x64xf32>
      %41 = tpu.matmul %39, %40, %cst_27 {dimension_numbers = #tpu.dot_dimension_numbers<[1], [0], [0], [1], [0, 0, 1, 1], [], []>} : vector<8x32xbf16>, vector<32x64xbf16>, vector<8x64xf32> -> vector<8x64xf32>
      %42 = vector.extract_strided_slice %41 {offsets = [0, 0], sizes = [8, 32], strides = [1, 1]} : vector<8x64xf32> to vector<8x32xf32>
      %43 = vector.extract_strided_slice %41 {offsets = [0, 32], sizes = [8, 16], strides = [1, 1]} : vector<8x64xf32> to vector<8x16xf32>
      %44 = vector.extract_strided_slice %41 {offsets = [0, 48], sizes = [8, 16], strides = [1, 1]} : vector<8x64xf32> to vector<8x16xf32>
      %c0_28 = arith.constant 0 : index
      %c0_29 = arith.constant 0 : index
      %45 = vector.load %arg3[%c0_28, %c0_29] : memref<8x8xf32, #tpu.memory_space<vmem>>, vector<8x8xf32>
      %c0_30 = arith.constant 0 : index
      %c0_31 = arith.constant 0 : index
      %46 = vector.load %arg4[%c0_30, %c0_31] : memref<8x8xf32, #tpu.memory_space<vmem>>, vector<8x8xf32>
      %47 = tpu.concatenate %45, %45 in 0 : vector<8x8xf32>, vector<8x8xf32> -> vector<16x8xf32>
      %48 = tpu.concatenate %46, %46 in 0 : vector<8x8xf32>, vector<8x8xf32> -> vector<16x8xf32>
      %49 = tpu.iota {dimensions = array<i32: 0>} : vector<8x8xi32>
      %50 = tpu.iota {dimensions = array<i32: 1>} : vector<8x8xi32>
      %51 = tpu.concatenate %49, %49 in 0 : vector<8x8xi32>, vector<8x8xi32> -> vector<16x8xi32>
      %52 = tpu.concatenate %50, %50 in 0 : vector<8x8xi32>, vector<8x8xi32> -> vector<16x8xi32>
      %53 = arith.cmpi sle, %52, %51 : vector<16x8xi32>
      %54 = vector.extract_strided_slice %43 {offsets = [0, 0], sizes = [8, 8], strides = [1, 1]} : vector<8x16xf32> to vector<8x8xf32>
      %55 = vector.extract_strided_slice %44 {offsets = [0, 0], sizes = [8, 8], strides = [1, 1]} : vector<8x16xf32> to vector<8x8xf32>
      %56 = arith.mulf %54, %45 : vector<8x8xf32>
      %57 = vector.extract_strided_slice %54 {offsets = [0, 4], sizes = [8, 4], strides = [1, 1]} : vector<8x8xf32> to vector<8x4xf32>
      %cst_32 = arith.constant 0.000000e+00 : f32
      %58 = vector.broadcast %cst_32 : f32 to vector<8x4xf32>
      %59 = arith.subf %58, %57 : vector<8x4xf32>
      %60 = vector.extract_strided_slice %54 {offsets = [0, 0], sizes = [8, 4], strides = [1, 1]} : vector<8x8xf32> to vector<8x4xf32>
      %61 = tpu.concatenate %59, %60 in 1 : vector<8x4xf32>, vector<8x4xf32> -> vector<8x8xf32>
      %62 = arith.mulf %61, %46 : vector<8x8xf32>
      %63 = arith.addf %56, %62 : vector<8x8xf32>
      %64 = arith.truncf %63 : vector<8x8xf32> to vector<8x8xbf16>
      %65 = arith.truncf %55 : vector<8x8xf32> to vector<8x8xbf16>
      %66 = vector.extract_strided_slice %42 {offsets = [0, 0], sizes = [8, 8], strides = [1, 1]} : vector<8x32xf32> to vector<8x8xf32>
      %67 = vector.extract_strided_slice %42 {offsets = [0, 8], sizes = [8, 8], strides = [1, 1]} : vector<8x32xf32> to vector<8x8xf32>
      %68 = tpu.concatenate %66, %67 in 0 : vector<8x8xf32>, vector<8x8xf32> -> vector<16x8xf32>
      %69 = arith.mulf %68, %47 : vector<16x8xf32>
      %70 = vector.extract_strided_slice %68 {offsets = [0, 4], sizes = [16, 4], strides = [1, 1]} : vector<16x8xf32> to vector<16x4xf32>
      %cst_33 = arith.constant 0.000000e+00 : f32
      %71 = vector.broadcast %cst_33 : f32 to vector<16x4xf32>
      %72 = arith.subf %71, %70 : vector<16x4xf32>
      %73 = vector.extract_strided_slice %68 {offsets = [0, 0], sizes = [16, 4], strides = [1, 1]} : vector<16x8xf32> to vector<16x4xf32>
      %74 = tpu.concatenate %72, %73 in 1 : vector<16x4xf32>, vector<16x4xf32> -> vector<16x8xf32>
      %75 = arith.mulf %74, %48 : vector<16x8xf32>
      %76 = arith.addf %69, %75 : vector<16x8xf32>
      %77 = arith.truncf %76 : vector<16x8xf32> to vector<16x8xbf16>
      %cst_34 = arith.constant dense<0.000000e+00> : vector<16x8xf32>
      %78 = tpu.matmul %77, %64, %cst_34 {dimension_numbers = #tpu.dot_dimension_numbers<[1], [1], [0], [0], [0, 0, 1, 0], [], []>} : vector<16x8xbf16>, vector<8x8xbf16>, vector<16x8xf32> -> vector<16x8xf32>
      %cst_35 = arith.constant 0.353553385 : f32
      %79 = vector.broadcast %cst_35 : f32 to vector<16x8xf32>
      %80 = arith.mulf %78, %79 : vector<16x8xf32>
      %cst_36 = arith.constant -1.000000e+30 : f32
      %81 = vector.broadcast %cst_36 : f32 to vector<16x8xf32>
      %82 = arith.select %53, %80, %81 : vector<16x8xi1>, vector<16x8xf32>
      %cst_37 = arith.constant dense<0xFF800000> : vector<16xf32>
      %83 = vector.multi_reduction <maximumf>, %82, %cst_37 [1] : vector<16x8xf32> to vector<16xf32>
      %84 = vector.shape_cast %83 : vector<16xf32> to vector<16x1xf32>
      %85 = vector.broadcast %84 : vector<16x1xf32> to vector<16x8xf32>
      %86 = arith.subf %82, %85 : vector<16x8xf32>
      %87 = math.exp %86 : vector<16x8xf32>
      %cst_38 = arith.constant dense<0.000000e+00> : vector<16xf32>
      %88 = vector.multi_reduction <add>, %87, %cst_38 [1] : vector<16x8xf32> to vector<16xf32>
      %89 = vector.shape_cast %88 : vector<16xf32> to vector<16x1xf32>
      %90 = arith.truncf %87 : vector<16x8xf32> to vector<16x8xbf16>
      %cst_39 = arith.constant dense<0.000000e+00> : vector<16x8xf32>
      %91 = tpu.matmul %90, %65, %cst_39 {dimension_numbers = #tpu.dot_dimension_numbers<[1], [0], [0], [1], [0, 0, 1, 1], [], []>} : vector<16x8xbf16>, vector<8x8xbf16>, vector<16x8xf32> -> vector<16x8xf32>
      %92 = tpu.reciprocal %89 {approx = true} : vector<16x1xf32> -> vector<16x1xf32>
      %93 = vector.broadcast %92 : vector<16x1xf32> to vector<16x8xf32>
      %94 = arith.mulf %91, %93 : vector<16x8xf32>
      %95 = vector.extract_strided_slice %94 {offsets = [0, 0], sizes = [8, 8], strides = [1, 1]} : vector<16x8xf32> to vector<8x8xf32>
      %96 = vector.extract_strided_slice %94 {offsets = [8, 0], sizes = [8, 8], strides = [1, 1]} : vector<16x8xf32> to vector<8x8xf32>
      %97 = tpu.concatenate %95, %96 in 1 : vector<8x8xf32>, vector<8x8xf32> -> vector<8x16xf32>
      %98 = arith.truncf %97 : vector<8x16xf32> to vector<8x16xbf16>
      %c0_40 = arith.constant 0 : index
      %c0_41 = arith.constant 0 : index
      %99 = vector.load %arg6[%c0_40, %c0_41] : memref<32x32xbf16, #tpu.memory_space<vmem>>, vector<16x32xbf16>
      %cst_42 = arith.constant dense<0.000000e+00> : vector<8x32xf32>
      %100 = tpu.matmul %98, %99, %cst_42 {dimension_numbers = #tpu.dot_dimension_numbers<[1], [0], [0], [1], [0, 0, 1, 1], [], []>} : vector<8x16xbf16>, vector<16x32xbf16>, vector<8x32xf32> -> vector<8x32xf32>
      %101 = arith.addf %25, %100 : vector<8x32xf32>
      %102 = vector.extract_strided_slice %43 {offsets = [0, 8], sizes = [8, 8], strides = [1, 1]} : vector<8x16xf32> to vector<8x8xf32>
      %103 = vector.extract_strided_slice %44 {offsets = [0, 8], sizes = [8, 8], strides = [1, 1]} : vector<8x16xf32> to vector<8x8xf32>
      %104 = arith.mulf %102, %45 : vector<8x8xf32>
      %105 = vector.extract_strided_slice %102 {offsets = [0, 4], sizes = [8, 4], strides = [1, 1]} : vector<8x8xf32> to vector<8x4xf32>
      %cst_43 = arith.constant 0.000000e+00 : f32
      %106 = vector.broadcast %cst_43 : f32 to vector<8x4xf32>
      %107 = arith.subf %106, %105 : vector<8x4xf32>
      %108 = vector.extract_strided_slice %102 {offsets = [0, 0], sizes = [8, 4], strides = [1, 1]} : vector<8x8xf32> to vector<8x4xf32>
      %109 = tpu.concatenate %107, %108 in 1 : vector<8x4xf32>, vector<8x4xf32> -> vector<8x8xf32>
      %110 = arith.mulf %109, %46 : vector<8x8xf32>
      %111 = arith.addf %104, %110 : vector<8x8xf32>
      %112 = arith.truncf %111 : vector<8x8xf32> to vector<8x8xbf16>
      %113 = arith.truncf %103 : vector<8x8xf32> to vector<8x8xbf16>
      %114 = vector.extract_strided_slice %42 {offsets = [0, 16], sizes = [8, 8], strides = [1, 1]} : vector<8x32xf32> to vector<8x8xf32>
      %115 = vector.extract_strided_slice %42 {offsets = [0, 24], sizes = [8, 8], strides = [1, 1]} : vector<8x32xf32> to vector<8x8xf32>
      %116 = tpu.concatenate %114, %115 in 0 : vector<8x8xf32>, vector<8x8xf32> -> vector<16x8xf32>
      %117 = arith.mulf %116, %47 : vector<16x8xf32>
      %118 = vector.extract_strided_slice %116 {offsets = [0, 4], sizes = [16, 4], strides = [1, 1]} : vector<16x8xf32> to vector<16x4xf32>
      %cst_44 = arith.constant 0.000000e+00 : f32
      %119 = vector.broadcast %cst_44 : f32 to vector<16x4xf32>
      %120 = arith.subf %119, %118 : vector<16x4xf32>
      %121 = vector.extract_strided_slice %116 {offsets = [0, 0], sizes = [16, 4], strides = [1, 1]} : vector<16x8xf32> to vector<16x4xf32>
      %122 = tpu.concatenate %120, %121 in 1 : vector<16x4xf32>, vector<16x4xf32> -> vector<16x8xf32>
      %123 = arith.mulf %122, %48 : vector<16x8xf32>
      %124 = arith.addf %117, %123 : vector<16x8xf32>
      %125 = arith.truncf %124 : vector<16x8xf32> to vector<16x8xbf16>
      %cst_45 = arith.constant dense<0.000000e+00> : vector<16x8xf32>
      %126 = tpu.matmul %125, %112, %cst_45 {dimension_numbers = #tpu.dot_dimension_numbers<[1], [1], [0], [0], [0, 0, 1, 0], [], []>} : vector<16x8xbf16>, vector<8x8xbf16>, vector<16x8xf32> -> vector<16x8xf32>
      %cst_46 = arith.constant 0.353553385 : f32
      %127 = vector.broadcast %cst_46 : f32 to vector<16x8xf32>
      %128 = arith.mulf %126, %127 : vector<16x8xf32>
      %cst_47 = arith.constant -1.000000e+30 : f32
      %129 = vector.broadcast %cst_47 : f32 to vector<16x8xf32>
      %130 = arith.select %53, %128, %129 : vector<16x8xi1>, vector<16x8xf32>
      %cst_48 = arith.constant dense<0xFF800000> : vector<16xf32>
      %131 = vector.multi_reduction <maximumf>, %130, %cst_48 [1] : vector<16x8xf32> to vector<16xf32>
      %132 = vector.shape_cast %131 : vector<16xf32> to vector<16x1xf32>
      %133 = vector.broadcast %132 : vector<16x1xf32> to vector<16x8xf32>
      %134 = arith.subf %130, %133 : vector<16x8xf32>
      %135 = math.exp %134 : vector<16x8xf32>
      %cst_49 = arith.constant dense<0.000000e+00> : vector<16xf32>
      %136 = vector.multi_reduction <add>, %135, %cst_49 [1] : vector<16x8xf32> to vector<16xf32>
      %137 = vector.shape_cast %136 : vector<16xf32> to vector<16x1xf32>
      %138 = arith.truncf %135 : vector<16x8xf32> to vector<16x8xbf16>
      %cst_50 = arith.constant dense<0.000000e+00> : vector<16x8xf32>
      %139 = tpu.matmul %138, %113, %cst_50 {dimension_numbers = #tpu.dot_dimension_numbers<[1], [0], [0], [1], [0, 0, 1, 1], [], []>} : vector<16x8xbf16>, vector<8x8xbf16>, vector<16x8xf32> -> vector<16x8xf32>
      %140 = tpu.reciprocal %137 {approx = true} : vector<16x1xf32> -> vector<16x1xf32>
      %141 = vector.broadcast %140 : vector<16x1xf32> to vector<16x8xf32>
      %142 = arith.mulf %139, %141 : vector<16x8xf32>
      %143 = vector.extract_strided_slice %142 {offsets = [0, 0], sizes = [8, 8], strides = [1, 1]} : vector<16x8xf32> to vector<8x8xf32>
      %144 = vector.extract_strided_slice %142 {offsets = [8, 0], sizes = [8, 8], strides = [1, 1]} : vector<16x8xf32> to vector<8x8xf32>
      %145 = tpu.concatenate %143, %144 in 1 : vector<8x8xf32>, vector<8x8xf32> -> vector<8x16xf32>
      %146 = arith.truncf %145 : vector<8x16xf32> to vector<8x16xbf16>
      %c16 = arith.constant 16 : index
      %c0_51 = arith.constant 0 : index
      %147 = vector.load %arg6[%c16, %c0_51] : memref<32x32xbf16, #tpu.memory_space<vmem>>, vector<16x32xbf16>
      %cst_52 = arith.constant dense<0.000000e+00> : vector<8x32xf32>
      %148 = tpu.matmul %146, %147, %cst_52 {dimension_numbers = #tpu.dot_dimension_numbers<[1], [0], [0], [1], [0, 0, 1, 1], [], []>} : vector<8x16xbf16>, vector<16x32xbf16>, vector<8x32xf32> -> vector<8x32xf32>
      %149 = arith.addf %101, %148 : vector<8x32xf32>
      %c0_53 = arith.constant 0 : index
      %c0_54 = arith.constant 0 : index
      %c0_55 = arith.constant 0 : index
      %150 = vector.load %arg12[%c0_53, %c0_54, %c0_55] : memref<1x8x32xf32, #tpu.memory_space<vmem>>, vector<1x8x32xf32>
      %151 = vector.shape_cast %150 : vector<1x8x32xf32> to vector<8x32xf32>
      %152 = vector.shape_cast %149 : vector<8x32xf32> to vector<1x8x32xf32>
      tpu.vector_store %arg12[%c0_53, %c0_54, %c0_55], %152 {strides = array<i32>} : memref<1x8x32xf32, #tpu.memory_space<vmem>>, vector<1x8x32xf32>,
      %c0_56 = arith.constant 0 : index
      %c0_57 = arith.constant 0 : index
      %153 = vector.load %arg8[%c0_56, %c0_57] : memref<1x32xf32, #tpu.memory_space<vmem>>, vector<1x32xf32>
      %154 = arith.mulf %149, %149 : vector<8x32xf32>
      %cst_58 = arith.constant dense<0.000000e+00> : vector<8xf32>
      %155 = vector.multi_reduction <add>, %154, %cst_58 [1] : vector<8x32xf32> to vector<8xf32>
      %156 = vector.shape_cast %155 : vector<8xf32> to vector<8x1xf32>
      %cst_59 = arith.constant 3.200000e+01 : f32
      %157 = vector.broadcast %cst_59 : f32 to vector<8x1xf32>
      %158 = arith.divf %156, %157 : vector<8x1xf32>
      %cst_60 = arith.constant 9.99999974E-6 : f32
      %159 = vector.broadcast %cst_60 : f32 to vector<8x1xf32>
      %160 = arith.addf %158, %159 : vector<8x1xf32>
      %161 = math.rsqrt %160 : vector<8x1xf32>
      %162 = vector.broadcast %161 : vector<8x1xf32> to vector<8x32xf32>
      %163 = arith.mulf %149, %162 : vector<8x32xf32>
      %164 = vector.broadcast %153 : vector<1x32xf32> to vector<8x32xf32>
      %165 = arith.mulf %163, %164 : vector<8x32xf32>
      %166 = arith.truncf %165 : vector<8x32xf32> to vector<8x32xbf16>
      %c0_61 = arith.constant 0 : index
      %c0_62 = arith.constant 0 : index
      %167 = vector.load %arg13[%c0_61, %c0_62] : memref<8x32xbf16, #tpu.memory_space<vmem>>, vector<8x32xbf16>
      tpu.vector_store %arg13[%c0_61, %c0_62], %166 {strides = array<i32>} : memref<8x32xbf16, #tpu.memory_space<vmem>>, vector<8x32xbf16>,
    } else {
    }
    %c0 = arith.constant 0 : index
    %c0_1 = arith.constant 0 : index
    %3 = vector.load %arg13[%c0, %c0_1] : memref<8x32xbf16, #tpu.memory_space<vmem>>, vector<8x32xbf16>
    %c0_2 = arith.constant 0 : index
    %c0_3 = arith.constant 0 : index
    %4 = vector.load %arg9[%c0_2, %c0_3] : memref<32x64xbf16, #tpu.memory_space<vmem>>, vector<32x64xbf16>
    %cst = arith.constant dense<0.000000e+00> : vector<8x64xf32>
    %5 = tpu.matmul %3, %4, %cst {dimension_numbers = #tpu.dot_dimension_numbers<[1], [0], [0], [1], [0, 0, 1, 1], [], []>} : vector<8x32xbf16>, vector<32x64xbf16>, vector<8x64xf32> -> vector<8x64xf32>
    %c0_4 = arith.constant 0 : index
    %c0_5 = arith.constant 0 : index
    %6 = vector.load %arg10[%c0_4, %c0_5] : memref<32x64xbf16, #tpu.memory_space<vmem>>, vector<32x64xbf16>
    %cst_6 = arith.constant dense<0.000000e+00> : vector<8x64xf32>
    %7 = tpu.matmul %3, %6, %cst_6 {dimension_numbers = #tpu.dot_dimension_numbers<[1], [0], [0], [1], [0, 0, 1, 1], [], []>} : vector<8x32xbf16>, vector<32x64xbf16>, vector<8x64xf32> -> vector<8x64xf32>
    %8 = arith.negf %7 : vector<8x64xf32>
    %9 = math.exp %8 : vector<8x64xf32>
    %cst_7 = arith.constant 1.000000e+00 : f32
    %10 = vector.broadcast %cst_7 : f32 to vector<8x64xf32>
    %11 = arith.addf %10, %9 : vector<8x64xf32>
    %12 = arith.divf %10, %11 : vector<8x64xf32>
    %13 = arith.mulf %7, %12 : vector<8x64xf32>
    %14 = arith.mulf %5, %13 : vector<8x64xf32>
    %15 = arith.truncf %14 : vector<8x64xf32> to vector<8x64xbf16>
    %c0_8 = arith.constant 0 : index
    %c0_9 = arith.constant 0 : index
    %c0_10 = arith.constant 0 : index
    %16 = vector.load %arg12[%c0_8, %c0_9, %c0_10] : memref<1x8x32xf32, #tpu.memory_space<vmem>>, vector<1x8x32xf32>
    %17 = vector.shape_cast %16 : vector<1x8x32xf32> to vector<8x32xf32>
    %c0_11 = arith.constant 0 : index
    %c0_12 = arith.constant 0 : index
    %18 = vector.load %arg11[%c0_11, %c0_12] : memref<64x32xbf16, #tpu.memory_space<vmem>>, vector<64x32xbf16>
    %cst_13 = arith.constant dense<0.000000e+00> : vector<8x32xf32>
    %19 = tpu.matmul %15, %18, %cst_13 {dimension_numbers = #tpu.dot_dimension_numbers<[1], [0], [0], [1], [0, 0, 1, 1], [], []>} : vector<8x64xbf16>, vector<64x32xbf16>, vector<8x32xf32> -> vector<8x32xf32>
    %20 = arith.addf %17, %19 : vector<8x32xf32>
    %c0_14 = arith.constant 0 : index
    %c0_15 = arith.constant 0 : index
    %c0_16 = arith.constant 0 : index
    %21 = vector.load %arg12[%c0_14, %c0_15, %c0_16] : memref<1x8x32xf32, #tpu.memory_space<vmem>>, vector<1x8x32xf32>
    %22 = vector.shape_cast %21 : vector<1x8x32xf32> to vector<8x32xf32>
    %23 = vector.shape_cast %20 : vector<8x32xf32> to vector<1x8x32xf32>
    tpu.vector_store %arg12[%c0_14, %c0_15, %c0_16], %23 {strides = array<i32>} : memref<1x8x32xf32, #tpu.memory_space<vmem>>, vector<1x8x32xf32>,
    return
  }
  func.func @transform_0(%arg0: i32, %arg1: i32) -> (i32, i32, i32) {
    %c0_i32 = arith.constant 0 : i32
    %c0_i32_0 = arith.constant 0 : i32
    %c0_i32_1 = arith.constant 0 : i32
    return %arg0, %c0_i32, %c0_i32_0 : i32, i32, i32
  }
  func.func @transform_1(%arg0: i32, %arg1: i32) -> (i32, i32) {
    %c0_i32 = arith.constant 0 : i32
    %c0_i32_0 = arith.constant 0 : i32
    %c0_i32_1 = arith.constant 0 : i32
    return %c0_i32, %c0_i32_0 : i32, i32
  }
  func.func @transform_2(%arg0: i32, %arg1: i32) -> (i32, i32) {
    %c0_i32 = arith.constant 0 : i32
    %c0_i32_0 = arith.constant 0 : i32
    %c0_i32_1 = arith.constant 0 : i32
    return %c0_i32, %c0_i32_0 : i32, i32
  }
  func.func @transform_3(%arg0: i32, %arg1: i32) -> (i32, i32) {
    %c0_i32 = arith.constant 0 : i32
    %c0_i32_0 = arith.constant 0 : i32
    %c0_i32_1 = arith.constant 0 : i32
    return %c0_i32, %c0_i32_0 : i32, i32
  }
  func.func @transform_4(%arg0: i32, %arg1: i32) -> (i32, i32) {
    %c0_i32 = arith.constant 0 : i32
    %c0_i32_0 = arith.constant 0 : i32
    %c0_i32_1 = arith.constant 0 : i32
    return %c0_i32, %c0_i32_0 : i32, i32
  }
  func.func @transform_5(%arg0: i32, %arg1: i32) -> (i32, i32) {
    %c0_i32 = arith.constant 0 : i32
    %c0_i32_0 = arith.constant 0 : i32
    %c0_i32_1 = arith.constant 0 : i32
    return %c0_i32, %c0_i32_0 : i32, i32
  }
  func.func @transform_6(%arg0: i32, %arg1: i32) -> (i32, i32) {
    %c0_i32 = arith.constant 0 : i32
    %c0_i32_0 = arith.constant 0 : i32
    %c0_i32_1 = arith.constant 0 : i32
    return %c0_i32, %c0_i32_0 : i32, i32
  }
  func.func @transform_7(%arg0: i32, %arg1: i32) -> (i32, i32) {
    %c0_i32 = arith.constant 0 : i32
    %c0_i32_0 = arith.constant 0 : i32
    return %c0_i32, %arg1 : i32, i32
  }
  func.func @transform_8(%arg0: i32, %arg1: i32) -> (i32, i32) {
    %c0_i32 = arith.constant 0 : i32
    %c0_i32_0 = arith.constant 0 : i32
    return %c0_i32, %arg1 : i32, i32
  }
  func.func @transform_9(%arg0: i32, %arg1: i32) -> (i32, i32) {
    %c0_i32 = arith.constant 0 : i32
    %c0_i32_0 = arith.constant 0 : i32
    return %arg1, %c0_i32 : i32, i32
  }
  func.func @transform_10(%arg0: i32, %arg1: i32) -> (i32, i32, i32) {
    %c0_i32 = arith.constant 0 : i32
    %c0_i32_0 = arith.constant 0 : i32
    %c0_i32_1 = arith.constant 0 : i32
    return %arg0, %c0_i32, %c0_i32_0 : i32, i32, i32
  }
}

</mosaic_0001>

<llo_original>
// kernel: tpu_custom_call.1
$region0: #{tpu_custom_call.1}
  #allocation0 [shape = 'u32[]', space=smem, size = 0x4, offset = 0x4, fixed_abs, tag = 'smem constant byte address 0x4 - core index']
  #allocation1 [shape = 'u32[72,128]{1,0:T(1,128)}', space=vmem, size = 0x9000, scoped, tag = 'internal scratch']
  #allocation2 [shape = 'bf16[8,32]{1,0:T(8,128)(2,1)}', space=vmem, size = 0x800, scoped, tag = 'scratch operand']
  %s0 = inlined_call_operand.vmem [shape: f32[2,8,32], index: 0, kind: input, shape index: {}]
  %s1 = inlined_call_operand.hbm [shape: f32[8,8], index: 1, kind: input, shape index: {}]
  %s2 = inlined_call_operand.hbm [shape: f32[8,8], index: 2, kind: input, shape index: {}]
  %s3 = inlined_call_operand.vmem [shape: bf16[32,64], index: 3, kind: input, shape index: {}]
  %s4 = inlined_call_operand.vmem [shape: bf16[32,32], index: 4, kind: input, shape index: {}]
  %s5 = inlined_call_operand.vmem [shape: f32[1,32], index: 5, kind: input, shape index: {}]
  %s6 = inlined_call_operand.vmem [shape: f32[1,32], index: 6, kind: input, shape index: {}]
  %s7 = inlined_call_operand.hbm [shape: bf16[32,64], index: 7, kind: input, shape index: {}]
  %s8 = inlined_call_operand.hbm [shape: bf16[32,64], index: 8, kind: input, shape index: {}]
  %s9 = inlined_call_operand.vmem [shape: bf16[64,32], index: 9, kind: input, shape index: {}]
  %s10 = inlined_call_operand.hbm [shape: f32[2,8,32], index: 10, kind: output, shape index: {}]
  %s11 = sld [smem:[#allocation0]]
  $region93: #{tpu_custom_call.1} parent=0
    _
  %s13 = ssub.s32 1, %s11
  %s14 = scalar_select 0, %s13, %s11
  $region1: #{tpu_custom_call.1} parent=0
    #allocation3 [shape = 'u8[4096]{0}', space=vmem, size = 0x1000, scoped, tag = 'input window, operand 1, single buffered']
    #allocation4 [shape = 's32[2]{0}', space=sflag, size = 0x8, scoped, tag = 'scoped memory for tpu_custom_call.1']
    #allocation5 [shape = 's32[2]{0}', space=sflag, size = 0x8, scoped, tag = 'scoped memory for tpu_custom_call.1']
    #allocation6 [shape = 'u8[4096]{0}', space=vmem, size = 0x1000, scoped, tag = 'input window, operand 2, single buffered']
    #allocation7 [shape = 's32[1]{0}', space=sflag, size = 0x4, scoped, tag = 'scoped memory for tpu_custom_call.1']
    #allocation8 [shape = 'u8[8192]{0}', space=vmem, size = 0x2000, scoped, tag = 'input window, operand 7, single buffered']
    #allocation9 [shape = 'u8[8192]{0}', space=vmem, size = 0x2000, scoped, tag = 'input window, operand 8, single buffered']
    #allocation10 [shape = 's32[1]{0}', space=sflag, size = 0x4, scoped, tag = 'scoped memory for tpu_custom_call.1']
    #allocation11 [shape = 'u8[8192]{0}', space=vmem, size = 0x2000, scoped, tag = 'output window, operand 0']
    %15 = vsyncpa [#allocation4], 0
    %16 = vsyncpa [#allocation7], 0
    %17 = vsyncpa [#allocation10], 0
    %18 = vsyncpa [#allocation5], 0
    %s19 = scalar_lea.sflag [#allocation5], 1
    %20 = vsyncpa %s19, 0
    loop: start=0, step=1, limit=4
    $region2: #{tpu_custom_call.1} parent=1 // loop_pre_header
      _
    $region3: #{tpu_custom_call.1} parent=1 // loop_header
      %s22 = sphi 0, %s26
      %p23 = scmp.ge.s32.totalorder %s22, 4
      %s29 = sphi 0, %s41
      %s30 = sphi 0, %s37
      %s31 = sphi 0, %s29
      %s32 = sphi 0, %s30
      %s33 = sphi 0, %s31
      %s34 = sphi 0, %s32
      %s44 = sphi 0, %s46
      %s47 = sphi 0, %s44
      %s48 = sphi 0, %s47
      %s64 = sphi 0, %s48
      %s68 = sphi 0, %s68
      %s70 = sphi 0, %s68
      %s71 = sphi 0, %s70
      %s85 = sphi 0, %s71
      %s89 = sphi 0, %s89
      %s91 = sphi 0, %s89
      %s92 = sphi 0, %s91
      %s106 = sphi 0, %s92
      %s110 = sphi 0, %s110
      %s112 = sphi 0, %s110
      %s113 = sphi 0, %s112
      %s127 = sphi 0, %s113
      %s131 = sphi 0, %s131
      %s133 = sphi 0, %s131
      %s134 = sphi 0, %s133
      %s148 = sphi 0, %s134
      %s152 = sphi 0, %s152
      %s154 = sphi 0, %s152
      %s155 = sphi 0, %s154
      %s169 = sphi 0, %s155
      %s173 = sphi 0, %s173
      %s175 = sphi 0, %s173
      %s176 = sphi 0, %s175
      %s190 = sphi 0, %s176
      %s196 = sphi 0, %s198
      %s199 = sphi 0, %s196
      %s200 = sphi 0, %s199
      %s216 = sphi 0, %s200
      %s222 = sphi 0, %s224
      %s225 = sphi 0, %s222
      %s226 = sphi 0, %s225
      %s242 = sphi 0, %s226
      %s248 = sphi 0, %s250
      %s251 = sphi 0, %s248
      %s252 = sphi 0, %s251
      %s268 = sphi 0, %s252
      %s274 = sphi 0, %s276
      %s277 = sphi 0, %s274
      %s278 = sphi 0, %s277
      %s294 = sphi 0, %s278
    $region4: #{tpu_custom_call.1} parent=1 // loop_header_branch
      %25 = sbr.rel (%p23) target = $region8
    $region5: #{tpu_custom_call.1} parent=1 // loop_body
      %s27 = ssub.s32 %s22, 1
      %s28 = ssub.s32 %s22, 2
      %s35 = sadd.s32 1, %s30
      %p36 = scmp.ge.s32.totalorder %s35, 1
      %s37 = scalar_select %p36, 0, %s35
      %s38 = sadd.s32 1, %s29
      %s39 = scalar_select %p36, %s38, %s29
      %p40 = scmp.ge.s32.totalorder %s39, 2
      %s41 = scalar_select %p40, 0, %s39
      %s42 = ssub.s32 %s29, %s41
      %p43 = scmp.eq.s32.totalorder %s42, 0
      %s45 = sadd.s32 %s44, 1
      %s46 = scalar_select %p43, %s44, %s45
      %p49 = pneg %p43
      %p50 = scmp.eq.s32.totalorder %s22, 1
      %p51 = por %p49, %p50
      %p52 = scmp.ne.s32.totalorder %s44, %s47
      %p53 = scmp.eq.s32.totalorder %s22, 0
      %p54 = por %p52, %p53
      %p55 = scmp.ne.s32.totalorder %s44, %s47
      %p56 = scmp.eq.s32.totalorder %s27, 1
      %p57 = por %p55, %p56
      %p58 = scmp.ne.s32.totalorder %s47, %s48
      %p59 = scmp.eq.s32.totalorder %s27, 0
      %p60 = por %p58, %p59
      %p61 = scmp.ne.s32.totalorder %s47, %s48
      %p62 = scmp.eq.s32.totalorder %s28, 1
      %p63 = por %p61, %p62
      %p65 = scmp.ne.s32.totalorder %s48, %s64
      %p66 = scmp.eq.s32.totalorder %s28, 0
      %p67 = por %p65, %p66
      %s69 = sadd.s32 %s68, 1
      %p72 = scmp.eq.s32.totalorder %s22, 1
      %p73 = scmp.ne.s32.totalorder %s68, %s70
      %p74 = scmp.eq.s32.totalorder %s22, 0
      %p75 = por %p73, %p74
      %p76 = scmp.ne.s32.totalorder %s68, %s70
      %p77 = scmp.eq.s32.totalorder %s27, 1
      %p78 = por %p76, %p77
      %p79 = scmp.ne.s32.totalorder %s70, %s71
      %p80 = scmp.eq.s32.totalorder %s27, 0
      %p81 = por %p79, %p80
      %p82 = scmp.ne.s32.totalorder %s70, %s71
      %p83 = scmp.eq.s32.totalorder %s28, 1
      %p84 = por %p82, %p83
      %p86 = scmp.ne.s32.totalorder %s71, %s85
      %p87 = scmp.eq.s32.totalorder %s28, 0
      %p88 = por %p86, %p87
      %s90 = sadd.s32 %s89, 1
      %p93 = scmp.eq.s32.totalorder %s22, 1
      %p94 = scmp.ne.s32.totalorder %s89, %s91
      %p95 = scmp.eq.s32.totalorder %s22, 0
      %p96 = por %p94, %p95
      %p97 = scmp.ne.s32.totalorder %s89, %s91
      %p98 = scmp.eq.s32.totalorder %s27, 1
      %p99 = por %p97, %p98
      %p100 = scmp.ne.s32.totalorder %s91, %s92
      %p101 = scmp.eq.s32.totalorder %s27, 0
      %p102 = por %p100, %p101
      %p103 = scmp.ne.s32.totalorder %s91, %s92
      %p104 = scmp.eq.s32.totalorder %s28, 1
      %p105 = por %p103, %p104
      %p107 = scmp.ne.s32.totalorder %s92, %s106
      %p108 = scmp.eq.s32.totalorder %s28, 0
      %p109 = por %p107, %p108
      %s111 = sadd.s32 %s110, 1
      %p114 = scmp.eq.s32.totalorder %s22, 1
      %p115 = scmp.ne.s32.totalorder %s110, %s112
      %p116 = scmp.eq.s32.totalorder %s22, 0
      %p117 = por %p115, %p116
      %p118 = scmp.ne.s32.totalorder %s110, %s112
      %p119 = scmp.eq.s32.totalorder %s27, 1
      %p120 = por %p118, %p119
      %p121 = scmp.ne.s32.totalorder %s112, %s113
      %p122 = scmp.eq.s32.totalorder %s27, 0
      %p123 = por %p121, %p122
      %p124 = scmp.ne.s32.totalorder %s112, %s113
      %p125 = scmp.eq.s32.totalorder %s28, 1
      %p126 = por %p124, %p125
      %p128 = scmp.ne.s32.totalorder %s113, %s127
      %p129 = scmp.eq.s32.totalorder %s28, 0
      %p130 = por %p128, %p129
      %s132 = sadd.s32 %s131, 1
      %p135 = scmp.eq.s32.totalorder %s22, 1
      %p136 = scmp.ne.s32.totalorder %s131, %s133
      %p137 = scmp.eq.s32.totalorder %s22, 0
      %p138 = por %p136, %p137
      %p139 = scmp.ne.s32.totalorder %s131, %s133
      %p140 = scmp.eq.s32.totalorder %s27, 1
      %p141 = por %p139, %p140
      %p142 = scmp.ne.s32.totalorder %s133, %s134
      %p143 = scmp.eq.s32.totalorder %s27, 0
      %p144 = por %p142, %p143
      %p145 = scmp.ne.s32.totalorder %s133, %s134
      %p146 = scmp.eq.s32.totalorder %s28, 1
      %p147 = por %p145, %p146
      %p149 = scmp.ne.s32.totalorder %s134, %s148
      %p150 = scmp.eq.s32.totalorder %s28, 0
      %p151 = por %p149, %p150
      %s153 = sadd.s32 %s152, 1
      %p156 = scmp.eq.s32.totalorder %s22, 1
      %p157 = scmp.ne.s32.totalorder %s152, %s154
      %p158 = scmp.eq.s32.totalorder %s22, 0
      %p159 = por %p157, %p158
      %p160 = scmp.ne.s32.totalorder %s152, %s154
      %p161 = scmp.eq.s32.totalorder %s27, 1
      %p162 = por %p160, %p161
      %p163 = scmp.ne.s32.totalorder %s154, %s155
      %p164 = scmp.eq.s32.totalorder %s27, 0
      %p165 = por %p163, %p164
      %p166 = scmp.ne.s32.totalorder %s154, %s155
      %p167 = scmp.eq.s32.totalorder %s28, 1
      %p168 = por %p166, %p167
      %p170 = scmp.ne.s32.totalorder %s155, %s169
      %p171 = scmp.eq.s32.totalorder %s28, 0
      %p172 = por %p170, %p171
      %s174 = sadd.s32 %s173, 1
      %p177 = scmp.eq.s32.totalorder %s22, 1
      %p178 = scmp.ne.s32.totalorder %s173, %s175
      %p179 = scmp.eq.s32.totalorder %s22, 0
      %p180 = por %p178, %p179
      %p181 = scmp.ne.s32.totalorder %s173, %s175
      %p182 = scmp.eq.s32.totalorder %s27, 1
      %p183 = por %p181, %p182
      %p184 = scmp.ne.s32.totalorder %s175, %s176
      %p185 = scmp.eq.s32.totalorder %s27, 0
      %p186 = por %p184, %p185
      %p187 = scmp.ne.s32.totalorder %s175, %s176
      %p188 = scmp.eq.s32.totalorder %s28, 1
      %p189 = por %p187, %p188
      %p191 = scmp.ne.s32.totalorder %s176, %s190
      %p192 = scmp.eq.s32.totalorder %s28, 0
      %p193 = por %p191, %p192
      %s194 = ssub.s32 %s30, %s37
      %p195 = scmp.eq.s32.totalorder %s194, 0
      %s197 = sadd.s32 %s196, 1
      %s198 = scalar_select %p195, %s196, %s197
      %p201 = pneg %p195
      %p202 = scmp.eq.s32.totalorder %s22, 1
      %p203 = por %p201, %p202
      %p204 = scmp.ne.s32.totalorder %s196, %s199
      %p205 = scmp.eq.s32.totalorder %s22, 0
      %p206 = por %p204, %p205
      %p207 = scmp.ne.s32.totalorder %s196, %s199
      %p208 = scmp.eq.s32.totalorder %s27, 1
      %p209 = por %p207, %p208
      %p210 = scmp.ne.s32.totalorder %s199, %s200
      %p211 = scmp.eq.s32.totalorder %s27, 0
      %p212 = por %p210, %p211
      %p213 = scmp.ne.s32.totalorder %s199, %s200
      %p214 = scmp.eq.s32.totalorder %s28, 1
      %p215 = por %p213, %p214
      %p217 = scmp.ne.s32.totalorder %s200, %s216
      %p218 = scmp.eq.s32.totalorder %s28, 0
      %p219 = por %p217, %p218
      %s220 = ssub.s32 %s30, %s37
      %p221 = scmp.eq.s32.totalorder %s220, 0
      %s223 = sadd.s32 %s222, 1
      %s224 = scalar_select %p221, %s222, %s223
      %p227 = pneg %p221
      %p228 = scmp.eq.s32.totalorder %s22, 1
      %p229 = por %p227, %p228
      %p230 = scmp.ne.s32.totalorder %s222, %s225
      %p231 = scmp.eq.s32.totalorder %s22, 0
      %p232 = por %p230, %p231
      %p233 = scmp.ne.s32.totalorder %s222, %s225
      %p234 = scmp.eq.s32.totalorder %s27, 1
      %p235 = por %p233, %p234
      %p236 = scmp.ne.s32.totalorder %s225, %s226
      %p237 = scmp.eq.s32.totalorder %s27, 0
      %p238 = por %p236, %p237
      %p239 = scmp.ne.s32.totalorder %s225, %s226
      %p240 = scmp.eq.s32.totalorder %s28, 1
      %p241 = por %p239, %p240
      %p243 = scmp.ne.s32.totalorder %s226, %s242
      %p244 = scmp.eq.s32.totalorder %s28, 0
      %p245 = por %p243, %p244
      %s246 = ssub.s32 %s30, %s37
      %p247 = scmp.eq.s32.totalorder %s246, 0
      %s249 = sadd.s32 %s248, 1
      %s250 = scalar_select %p247, %s248, %s249
      %p253 = pneg %p247
      %p254 = scmp.eq.s32.totalorder %s22, 1
      %p255 = por %p253, %p254
      %p256 = scmp.ne.s32.totalorder %s248, %s251
      %p257 = scmp.eq.s32.totalorder %s22, 0
      %p258 = por %p256, %p257
      %p259 = scmp.ne.s32.totalorder %s248, %s251
      %p260 = scmp.eq.s32.totalorder %s27, 1
      %p261 = por %p259, %p260
      %p262 = scmp.ne.s32.totalorder %s251, %s252
      %p263 = scmp.eq.s32.totalorder %s27, 0
      %p264 = por %p262, %p263
      %p265 = scmp.ne.s32.totalorder %s251, %s252
      %p266 = scmp.eq.s32.totalorder %s28, 1
      %p267 = por %p265, %p266
      %p269 = scmp.ne.s32.totalorder %s252, %s268
      %p270 = scmp.eq.s32.totalorder %s28, 0
      %p271 = por %p269, %p270
      %s272 = ssub.s32 %s29, %s41
      %p273 = scmp.eq.s32.totalorder %s272, 0
      %s275 = sadd.s32 %s274, 1
      %s276 = scalar_select %p273, %s274, %s275
      %p279 = pneg %p273
      %p280 = scmp.eq.s32.totalorder %s22, 1
      %p281 = por %p279, %p280
      %p282 = scmp.ne.s32.totalorder %s274, %s277
      %p283 = scmp.eq.s32.totalorder %s22, 0
      %p284 = por %p282, %p283
      %p285 = scmp.ne.s32.totalorder %s274, %s277
      %p286 = scmp.eq.s32.totalorder %s27, 1
      %p287 = por %p285, %p286
      %p288 = scmp.ne.s32.totalorder %s277, %s278
      %p289 = scmp.eq.s32.totalorder %s27, 0
      %p290 = por %p288, %p289
      %p291 = scmp.ne.s32.totalorder %s277, %s278
      %p292 = scmp.eq.s32.totalorder %s28, 1
      %p293 = por %p291, %p292
      %p295 = scmp.ne.s32.totalorder %s278, %s294
      %p296 = scmp.eq.s32.totalorder %s28, 0
      %p297 = por %p295, %p296
      %p298 = scmp.le.s32.totalorder 1, %s22
      %p299 = scmp.lt.s32.totalorder %s22, 3
      %p300 = pnand %p298, %p299
      %p301 = pneg %p300
      // Predicated region
      $region9: #{tpu_custom_call.1} parent=5 // pred_check
        _
      $region10: #{tpu_custom_call.1} parent=5 // pred_check_branch
        %303 = sbr.rel (%p300) target = $region12
      $region11: #{tpu_custom_call.1} parent=5 // pred_region
        %s304 = ssub.s32 %s22, 1
        // Predicated region
        $region13: #{tpu_custom_call.1} parent=11 // pred_check
          %p305 = pneg %p81
        $region14: #{tpu_custom_call.1} parent=11 // pred_check_branch
          %307 = sbr.rel (%p305) target = $region16
        $region15: #{tpu_custom_call.1} parent=11 // pred_region
          %309 = vsyncadd [#allocation4], 0
          %s311 = sshll.u32 %s1, 4
          %s312 = int_to_ptr.hbm [resolvable:$true] %s311
          %s313 = sshll.u32 [#allocation3], 4
          %s314 = int_to_ptr.vmem [resolvable:$true] %s313
          %316 = dma.hbm_to_vmem [thread:$0]  %s312, 128, %s314, [#allocation4]
        $region16: #{tpu_custom_call.1} parent=11 // pred_fallthru
          _
        // Predicated region
        $region17: #{tpu_custom_call.1} parent=11 // pred_check
          %p317 = pneg %p102
        $region18: #{tpu_custom_call.1} parent=11 // pred_check_branch
          %319 = sbr.rel (%p317) target = $region20
        $region19: #{tpu_custom_call.1} parent=11 // pred_region
          %321 = vsyncadd [#allocation7], 0
          %s323 = sshll.u32 %s2, 4
          %s324 = int_to_ptr.hbm [resolvable:$true] %s323
          %s325 = sshll.u32 [#allocation6], 4
          %s326 = int_to_ptr.vmem [resolvable:$true] %s325
          %328 = dma.hbm_to_vmem [thread:$0]  %s324, 128, %s326, [#allocation7]
        $region20: #{tpu_custom_call.1} parent=11 // pred_fallthru
          _
        // Predicated region
        $region21: #{tpu_custom_call.1} parent=11 // pred_check
          %p329 = pneg %p123
        $region22: #{tpu_custom_call.1} parent=11 // pred_check_branch
          %331 = sbr.rel (%p329) target = $region24
        $region23: #{tpu_custom_call.1} parent=11 // pred_region
          _
        $region24: #{tpu_custom_call.1} parent=11 // pred_fallthru
          _
        // Predicated region
        $region25: #{tpu_custom_call.1} parent=11 // pred_check
          %p332 = pneg %p144
        $region26: #{tpu_custom_call.1} parent=11 // pred_check_branch
          %334 = sbr.rel (%p332) target = $region28
        $region27: #{tpu_custom_call.1} parent=11 // pred_region
          _
        $region28: #{tpu_custom_call.1} parent=11 // pred_fallthru
          _
        // Predicated region
        $region29: #{tpu_custom_call.1} parent=11 // pred_check
          %p335 = pneg %p165
        $region30: #{tpu_custom_call.1} parent=11 // pred_check_branch
          %337 = sbr.rel (%p335) target = $region32
        $region31: #{tpu_custom_call.1} parent=11 // pred_region
          _
        $region32: #{tpu_custom_call.1} parent=11 // pred_fallthru
          _
        // Predicated region
        $region33: #{tpu_custom_call.1} parent=11 // pred_check
          %p338 = pneg %p186
        $region34: #{tpu_custom_call.1} parent=11 // pred_check_branch
          %340 = sbr.rel (%p338) target = $region36
        $region35: #{tpu_custom_call.1} parent=11 // pred_region
          _
        $region36: #{tpu_custom_call.1} parent=11 // pred_fallthru
          _
        // Predicated region
        $region37: #{tpu_custom_call.1} parent=11 // pred_check
          %p341 = pneg %p212
        $region38: #{tpu_custom_call.1} parent=11 // pred_check_branch
          %343 = sbr.rel (%p341) target = $region40
        $region39: #{tpu_custom_call.1} parent=11 // pred_region
          %345 = vsyncadd [#allocation7], 0
          %s346 = smul.addr %s32, 4
          %s347 = scalar_lea.hbm %s7, %s346
          %s348 = sshll.u32 %s347, 4
          %s349 = int_to_ptr.hbm [resolvable:$true] %s348
          %s350 = sshll.u32 [#allocation8], 4
          %s351 = int_to_ptr.vmem [resolvable:$true] %s350
          %356 = dma.hbm_to_vmem [thread:$0]  %s349, 256, %s351, [#allocation7], 64, 64, 4
        $region40: #{tpu_custom_call.1} parent=11 // pred_fallthru
          _
        // Predicated region
        $region41: #{tpu_custom_call.1} parent=11 // pred_check
          %p357 = pneg %p238
        $region42: #{tpu_custom_call.1} parent=11 // pred_check_branch
          %359 = sbr.rel (%p357) target = $region44
        $region43: #{tpu_custom_call.1} parent=11 // pred_region
          %361 = vsyncadd [#allocation10], 0
          %s362 = smul.addr %s32, 4
          %s363 = scalar_lea.hbm %s8, %s362
          %s364 = sshll.u32 %s363, 4
          %s365 = int_to_ptr.hbm [resolvable:$true] %s364
          %s366 = sshll.u32 [#allocation9], 4
          %s367 = int_to_ptr.vmem [resolvable:$true] %s366
          %372 = dma.hbm_to_vmem [thread:$0]  %s365, 256, %s367, [#allocation10], 64, 64, 4
        $region44: #{tpu_custom_call.1} parent=11 // pred_fallthru
          _
        // Predicated region
        $region45: #{tpu_custom_call.1} parent=11 // pred_check
          %p373 = pneg %p264
        $region46: #{tpu_custom_call.1} parent=11 // pred_check_branch
          %375 = sbr.rel (%p373) target = $region48
        $region47: #{tpu_custom_call.1} parent=11 // pred_region
          %s376 = smul.u32 8, %s32
          %p377 = scmp.lt.s32.totalorder %s376, 7
          %s378 = scalar_select %p377, %s376, 7
          %s379 = smul.addr %s378, 4
          %s380 = scalar_lea.vmem %s9, %s379
          %s381 = smul.u32 8, %s32
        $region48: #{tpu_custom_call.1} parent=11 // pred_fallthru
          _
      $region12: #{tpu_custom_call.1} parent=5 // pred_fallthru
        _
      %p382 = scmp.lt.s32.totalorder %s22, 2
      // Predicated region
      $region49: #{tpu_custom_call.1} parent=5 // pred_check
        %p383 = pneg %p382
      $region50: #{tpu_custom_call.1} parent=5 // pred_check_branch
        %385 = sbr.rel (%p383) target = $region52
      $region51: #{tpu_custom_call.1} parent=5 // pred_region
        // Predicated region
        $region53: #{tpu_custom_call.1} parent=51 // pred_check
          %p386 = pneg %p54
        $region54: #{tpu_custom_call.1} parent=51 // pred_check_branch
          %388 = sbr.rel (%p386) target = $region56
        $region55: #{tpu_custom_call.1} parent=51 // pred_region
          %p389 = scmp.lt.s32.totalorder %s29, 1
          %s390 = scalar_select %p389, %s29, 1
          %s391 = smul.addr %s390, 8
          %s392 = scalar_lea.vmem %s0, %s391
        $region56: #{tpu_custom_call.1} parent=51 // pred_fallthru
          _
      $region52: #{tpu_custom_call.1} parent=5 // pred_fallthru
        _
      %p393 = scmp.le.s32.totalorder 1, %s22
      %p394 = scmp.lt.s32.totalorder %s22, 3
      %p395 = pnand %p393, %p394
      %p396 = pneg %p395
      // Predicated region
      $region57: #{tpu_custom_call.1} parent=5 // pred_check
        _
      $region58: #{tpu_custom_call.1} parent=5 // pred_check_branch
        %398 = sbr.rel (%p395) target = $region60
      $region59: #{tpu_custom_call.1} parent=5 // pred_region
        %s399 = ssub.s32 %s22, 1
        // Predicated region
        $region61: #{tpu_custom_call.1} parent=59 // pred_check
          %p400 = pneg %p81
        $region62: #{tpu_custom_call.1} parent=59 // pred_check_branch
          %402 = sbr.rel (%p400) target = $region64
        $region63: #{tpu_custom_call.1} parent=59 // pred_region
          %404 = dma.done [#allocation4], 128
        $region64: #{tpu_custom_call.1} parent=59 // pred_fallthru
          _
        // Predicated region
        $region65: #{tpu_custom_call.1} parent=59 // pred_check
          %p405 = pneg %p102
        $region66: #{tpu_custom_call.1} parent=59 // pred_check_branch
          %407 = sbr.rel (%p405) target = $region68
        $region67: #{tpu_custom_call.1} parent=59 // pred_region
          %409 = dma.done [#allocation7], 128
        $region68: #{tpu_custom_call.1} parent=59 // pred_fallthru
          _
        // Predicated region
        $region69: #{tpu_custom_call.1} parent=59 // pred_check
          %p410 = pneg %p212
        $region70: #{tpu_custom_call.1} parent=59 // pred_check_branch
          %412 = sbr.rel (%p410) target = $region72
        $region71: #{tpu_custom_call.1} parent=59 // pred_region
          %414 = dma.done [#allocation7], 256
        $region72: #{tpu_custom_call.1} parent=59 // pred_fallthru
          _
        // Predicated region
        $region73: #{tpu_custom_call.1} parent=59 // pred_check
          %p415 = pneg %p238
        $region74: #{tpu_custom_call.1} parent=59 // pred_check_branch
          %417 = sbr.rel (%p415) target = $region76
        $region75: #{tpu_custom_call.1} parent=59 // pred_region
          %419 = dma.done [#allocation10], 256
        $region76: #{tpu_custom_call.1} parent=59 // pred_fallthru
          _
        %p420 = scmp.lt.s32.totalorder %s31, 1
        %s421 = scalar_select %p420, %s31, 1
        %s422 = smul.addr %s421, 8
        %s423 = scalar_lea.vmem %s0, %s422
        %p424 = pneg %p60
        %p425 = pneg %p57
        %p426 = pneg %p81
        %p427 = pneg %p78
        %p428 = pneg %p102
        %p429 = pneg %p99
        %p430 = pneg %p123
        %p431 = pneg %p120
        %p432 = pneg %p144
        %p433 = pneg %p141
        %p434 = pneg %p165
        %p435 = pneg %p162
        %p436 = pneg %p186
        %p437 = pneg %p183
        %p438 = pneg %p212
        %p439 = pneg %p209
        %p440 = pneg %p238
        %p441 = pneg %p235
        %s442 = smul.u32 8, %s32
        %p443 = scmp.lt.s32.totalorder %s442, 7
        %s444 = scalar_select %p443, %s442, 7
        %s445 = smul.addr %s444, 4
        %s446 = scalar_lea.vmem %s9, %s445
        %p447 = pneg %p264
        %p448 = pneg %p261
        %p449 = pneg %p290
        %p450 = pneg %p287
        %s451 = sand.u32 %s277, 1
        %s452 = scalar_lea.sflag [#allocation5], %s451
        %s453 = sand.u32 %s277, 1
        %s454 = smul.addr %s453, 8
        %s455 = scalar_lea.vmem [#allocation11], %s454
        %p456 = scmp.lt.s32.totalorder %s31, 1
        %s457 = scalar_select %p456, %s31, 1
        %s458 = smul.addr %s457, 8
        %s459 = scalar_lea.vmem %s0, %s458
        %s460 = smul.u32 8, %s32
        %p461 = scmp.lt.s32.totalorder %s460, 7
        %s462 = scalar_select %p461, %s460, 7
        %s463 = smul.addr %s462, 4
        %s464 = scalar_lea.vmem %s9, %s463
        %s465 = smul.u32 8, %s32
        %p467 = scmp.eq.s32.totalorder %s32, 0
        // Predicated region
        $region77: #{tpu_custom_call.1} parent=59 // pred_check
          %p468 = pneg %p467
        $region78: #{tpu_custom_call.1} parent=59 // pred_check_branch
          %470 = sbr.rel (%p468) target = $region80
        $region79: #{tpu_custom_call.1} parent=59 // pred_region
          %v471 = vld [vmem:[%s459] sm:$0xff]
          %v472 = vld [vmem:[%s5] sm:$0x1]
          %v473 = vmul.f32 %v471, %v471
          %vm474 = vcmask 261120
          %v475 = vsel %vm474, %v473, 0.0
          %476 = vadd.xlane.f32.xlu0 %v475
          %v477 = vpop.xlane.xlu0 %476
          %v478 = vrcp.pop 32.0
          %v479 = vmul.f32 32.0, %v478
          %v480 = vsub.f32 1.0, %v479
          %v481 = vmul.f32 %v478, %v480
          %v482 = vadd.f32 %v478, %v481
          %vm483 = vweird.f32 %v478
          %v484 = vsel %vm483, %v478, %v482
          %v485 = vmul.f32 %v477, %v484
          %v486 = vadd.f32 %v485, 1e-05
          %v487 = vrsqrt.pop %v486
          %v488 = vmul.f32 %v487, %v486
          %v489 = vmul.f32 %v488, %v487
          %v490 = vmul.f32 0.5, %v489
          %v491 = vsub.f32 1.5, %v490
          %v492 = vmul.f32 %v487, %v491
          %vm493 = vweird.f32 %v486
          %vm494 = vweird.f32 %v487
          %vm495 = vmor %vm493, %vm494
          %v496 = vsel %vm495, %v487, %v492
          %v497 = vmul.f32 %v471, %v496
          %v499 = vperm.slane %v472, 0
          %v501 = vmul.f32 %v497, %v499
          %v502 = vpack.c.bf16 %v501, %v501
          %v503 = vld [vmem:[%s3] sm:$0xf]
          %v504 = vld [vmem:[%s3 + $0x4] sm:$0xf]
          %v505 = vld [vmem:[%s3 + $0x8] sm:$0xf]
          %v506 = vld [vmem:[%s3 + $0xc] sm:$0xf]
          %v511 = vunpack.c.l.b16 %v503
          %v512 = vunpack.c.l.b16 %v504
          %v513 = vunpack.c.l.b16 %v505
          %v514 = vunpack.c.l.b16 %v506
          %v515 = vpack.c.b16 %v512, %v511
          %v516 = vpack.c.b16 %v514, %v513
          %v520 = vsel %vm474, %v502, 0
          %522 = vmatpush.bf16.msra.mxu0 0
          %523 = vmatpush.bf16.msra.mxu0 0
          %524 = vmatpush.bf16.msra.mxu0 0
          %525 = vmatpush.bf16.msra.mxu0 0
          %526 = vmatpush.bf16.msra.mxu0 0
          %527 = vmatpush.bf16.msra.mxu0 0
          %528 = vmatpush.bf16.msra.mxu0 %v516
          %529 = vmatpush.bf16.msra.mxu0 %v515
          %530 = vmatmul.bf16.gmra.mxu0 %v520
          %v531 = vpop.f32.mrf.mxu0
          %v532 = vadd.f32 0.0, %v531
          %v533 = vpop.f32.mrf.mxu0
          %534 = vdwg.mxu0
          %v535 = vld [vmem:[#allocation3] sm:$0xff]
          %v536 = vld [vmem:[#allocation6] sm:$0xff]
          %v537 = vlaneseq
          %v538 = vshrl.u32 %v537, 7
          %v539 = vlaneseq
          %v540 = vand.u32 %v539, 127
          %vm541 = vcmp.le.s32.totalorder %v540, %v538
          %543 = vrot.lane.b32.xlu0 %v535, 32
          %v544 = vpop.permute.xlu0 %543
          %v546 = vmul.f32 %v532, %v544
          %v547 = vsub.f32 0.0, %v532
          %549 = vrot.lane.b32.xlu0 %v547, 92
          %v550 = vpop.permute.xlu0 %549
          %553 = vrot.lane.b32.xlu0 %v532, 100
          %v554 = vpop.permute.xlu0 %553
          %vm556 = vcmask 31744
          %v557 = vsel %vm556, %v550, %v554
          %v558 = vmul.f32 %v557, %v536
          %560 = vrot.lane.b32.xlu0 %v558, 32
          %v561 = vpop.permute.xlu0 %560
          %v563 = vadd.f32 %v546, %v561
          %v564 = vpack.c.bf16 %v563, %v563
          %v565 = vpack.c.bf16 %v532, %v532
          %566 = vrot.lane.b32.xlu0 %v532, 120
          %v567 = vpop.permute.xlu0 %566
          %v569 = vmul.f32 %v532, %v535
          %v570 = vmul.f32 %v567, %v535
          %v571 = vsub.f32 0.0, %v567
          %573 = vrot.lane.b32.xlu0 %v547, 124
          %v574 = vpop.permute.xlu0 %573
          %575 = vrot.lane.b32.xlu0 %v571, 124
          %v576 = vpop.permute.xlu0 %575
          %579 = vrot.lane.b32.xlu0 %v532, 4
          %v580 = vpop.permute.xlu0 %579
          %581 = vrot.lane.b32.xlu0 %v567, 4
          %v582 = vpop.permute.xlu0 %581
          %v585 = vsel %vm556, %v574, %v580
          %v586 = vsel %vm556, %v576, %v582
          %v587 = vmul.f32 %v585, %v536
          %v588 = vmul.f32 %v586, %v536
          %v589 = vadd.f32 %v569, %v587
          %v590 = vadd.f32 %v570, %v588
          %v591 = vpack.c.bf16 %v590, %v589
          %593 = vrot.lane.b32.xlu0 %v564, 96
          %v594 = vpop.permute.xlu0 %593
          %vm595 = vcmask 64512
          %v597 = vsel %vm595, %v591, 0
          %v600 = vsel %vm595, %v594, 0
          %602 = vmatpush.bf16.xpose.msra.mxu0 0
          %603 = vmatpush.bf16.xpose.msra.mxu0 0
          %604 = vmatpush.bf16.xpose.msra.mxu0 0
          %605 = vmatpush.bf16.xpose.msra.mxu0 0
          %606 = vmatpush.bf16.xpose.msra.mxu0 0
          %607 = vmatpush.bf16.xpose.msra.mxu0 0
          %608 = vmatpush.bf16.xpose.msra.mxu0 0
          %609 = vmatpush.bf16.xpose.msra.mxu0 %v600
          %610 = vmatmul.bf16.gmra.mxu0 %v597
          %v611 = vpop.f32.mrf.mxu0
          %v612 = vadd.f32 0.0, %v611
          %v613 = vpop.f32.mrf.mxu0
          %v614 = vadd.f32 0.0, %v613
          %615 = vdwg.mxu0
          %v616 = vmul.f32 %v612, 0.35355338
          %v617 = vmul.f32 %v614, 0.35355338
          %v618 = vsel %vm541, %v616, -1e+30
          %v619 = vsel %vm541, %v617, -1e+30
          %v620 = vsel %vm595, %v618, -inf
          %621 = vmax.xlane.f32.xlu0 %v620
          %v622 = vpop.xlane.xlu0 %621
          %v623 = vsel %vm595, %v619, -inf
          %624 = vmax.xlane.f32.xlu0 %v623
          %v625 = vpop.xlane.xlu0 %624
          %v626 = vsub.f32 %v618, %v622
          %v627 = vsub.f32 %v619, %v625
          %v628 = vmul.f32 %v626, 1.442695
          %v629 = vpow.pop %v628
          %v630 = vmul.f32 %v627, 1.442695
          %v631 = vpow.pop %v630
          %v632 = vsel %vm595, %v629, 0.0
          %633 = vadd.xlane.f32.xlu0 %v632
          %v634 = vpop.xlane.xlu0 %633
          %v635 = vsel %vm595, %v631, 0.0
          %636 = vadd.xlane.f32.xlu0 %v635
          %v637 = vpop.xlane.xlu0 %636
          %v638 = vpack.c.bf16 %v631, %v629
          %640 = vrot.lane.b32.xlu0 %v565, 80
          %v641 = vpop.permute.xlu0 %640
          %v643 = vsel %vm595, %v638, 0
          %vm645 = vcmask 1043456
          %v647 = vsel %vm645, %v641, 0
          %649 = vmatpush.bf16.msra.mxu0 0
          %650 = vmatpush.bf16.msra.mxu0 0
          %651 = vmatpush.bf16.msra.mxu0 0
          %652 = vmatpush.bf16.msra.mxu0 0
          %653 = vmatpush.bf16.msra.mxu0 0
          %654 = vmatpush.bf16.msra.mxu0 0
          %655 = vmatpush.bf16.msra.mxu0 0
          %656 = vmatpush.bf16.msra.mxu0 %v647
          %657 = vmatmul.bf16.gmra.mxu0 %v643
          %v658 = vpop.f32.mrf.mxu0
          %v659 = vadd.f32 0.0, %v658
          %v660 = vpop.f32.mrf.mxu0
          %v661 = vadd.f32 0.0, %v660
          %662 = vdwg.mxu0
          %v663 = vrcp.pop %v634
          %v664 = vrcp.pop %v637
          %v665 = vmul.f32 %v659, %v663
          %v666 = vmul.f32 %v661, %v664
          %668 = vrot.lane.b32.xlu0 %v666, 8
          %v669 = vpop.permute.xlu0 %668
          %v671 = vsel %vm595, %v665, %v669
          %v672 = vpack.c.bf16 %v671, %v671
          %v673 = vld [vmem:[%s4] sm:$0xf]
          %v674 = vld [vmem:[%s4 + $0x4] sm:$0xf]
          %v677 = vunpack.c.l.b16 %v673
          %v678 = vunpack.c.l.b16 %v674
          %v679 = vpack.c.b16 %v678, %v677
          %vm681 = vcmask 130048
          %v683 = vsel %vm681, %v672, 0
          %685 = vmatpush.bf16.msra.mxu0 0
          %686 = vmatpush.bf16.msra.mxu0 0
          %687 = vmatpush.bf16.msra.mxu0 0
          %688 = vmatpush.bf16.msra.mxu0 0
          %689 = vmatpush.bf16.msra.mxu0 0
          %690 = vmatpush.bf16.msra.mxu0 0
          %691 = vmatpush.bf16.msra.mxu0 0
          %692 = vmatpush.bf16.msra.mxu0 %v679
          %693 = vmatmul.bf16.gmra.mxu0 %v683
          %v694 = vpop.f32.mrf.mxu0
          %v695 = vadd.f32 0.0, %v694
          %v696 = vpop.f32.mrf.mxu0
          %697 = vdwg.mxu0
          %v698 = vadd.f32 %v471, %v695
          %699 = vrot.lane.b32.xlu0 %v535, 40
          %v700 = vpop.permute.xlu0 %699
          %v702 = vmul.f32 %v532, %v700
          %703 = vrot.lane.b32.xlu0 %v547, 84
          %v704 = vpop.permute.xlu0 %703
          %706 = vrot.lane.b32.xlu0 %v532, 92
          %v707 = vpop.permute.xlu0 %706
          %v709 = vsel %vm556, %v704, %v707
          %v710 = vmul.f32 %v709, %v536
          %712 = vrot.lane.b32.xlu0 %v710, 40
          %v713 = vpop.permute.xlu0 %712
          %v715 = vadd.f32 %v702, %v713
          %v716 = vpack.c.bf16 %v715, %v715
          %717 = vrot.lane.b32.xlu0 %v535, 16
          %v718 = vpop.permute.xlu0 %717
          %v720 = vmul.f32 %v532, %v718
          %v721 = vmul.f32 %v567, %v718
          %722 = vrot.lane.b32.xlu0 %v547, 108
          %v723 = vpop.permute.xlu0 %722
          %724 = vrot.lane.b32.xlu0 %v571, 108
          %v725 = vpop.permute.xlu0 %724
          %728 = vrot.lane.b32.xlu0 %v532, 116
          %v729 = vpop.permute.xlu0 %728
          %730 = vrot.lane.b32.xlu0 %v567, 116
          %v731 = vpop.permute.xlu0 %730
          %v734 = vsel %vm556, %v723, %v729
          %v735 = vsel %vm556, %v725, %v731
          %v736 = vmul.f32 %v734, %v536
          %v737 = vmul.f32 %v735, %v536
          %740 = vrot.lane.b32.xlu0 %v736, 16
          %v741 = vpop.permute.xlu0 %740
          %742 = vrot.lane.b32.xlu0 %v737, 16
          %v743 = vpop.permute.xlu0 %742
          %v746 = vadd.f32 %v720, %v741
          %v747 = vadd.f32 %v721, %v743
          %v748 = vpack.c.bf16 %v747, %v746
          %750 = vrot.lane.b32.xlu0 %v748, 112
          %v751 = vpop.permute.xlu0 %750
          %753 = vrot.lane.b32.xlu0 %v716, 88
          %v754 = vpop.permute.xlu0 %753
          %v756 = vsel %vm595, %v751, 0
          %v759 = vsel %vm595, %v754, 0
          %761 = vmatpush.bf16.xpose.msra.mxu0 0
          %762 = vmatpush.bf16.xpose.msra.mxu0 0
          %763 = vmatpush.bf16.xpose.msra.mxu0 0
          %764 = vmatpush.bf16.xpose.msra.mxu0 0
          %765 = vmatpush.bf16.xpose.msra.mxu0 0
          %766 = vmatpush.bf16.xpose.msra.mxu0 0
          %767 = vmatpush.bf16.xpose.msra.mxu0 0
          %768 = vmatpush.bf16.xpose.msra.mxu0 %v759
          %769 = vmatmul.bf16.gmra.mxu0 %v756
          %v770 = vpop.f32.mrf.mxu0
          %v771 = vadd.f32 0.0, %v770
          %v772 = vpop.f32.mrf.mxu0
          %v773 = vadd.f32 0.0, %v772
          %774 = vdwg.mxu0
          %v775 = vmul.f32 %v771, 0.35355338
          %v776 = vmul.f32 %v773, 0.35355338
          %v777 = vsel %vm541, %v775, -1e+30
          %v778 = vsel %vm541, %v776, -1e+30
          %v779 = vsel %vm595, %v777, -inf
          %780 = vmax.xlane.f32.xlu0 %v779
          %v781 = vpop.xlane.xlu0 %780
          %v782 = vsel %vm595, %v778, -inf
          %783 = vmax.xlane.f32.xlu0 %v782
          %v784 = vpop.xlane.xlu0 %783
          %v785 = vsub.f32 %v777, %v781
          %v786 = vsub.f32 %v778, %v784
          %v787 = vmul.f32 %v785, 1.442695
          %v788 = vpow.pop %v787
          %v789 = vmul.f32 %v786, 1.442695
          %v790 = vpow.pop %v789
          %v791 = vsel %vm595, %v788, 0.0
          %792 = vadd.xlane.f32.xlu0 %v791
          %v793 = vpop.xlane.xlu0 %792
          %v794 = vsel %vm595, %v790, 0.0
          %795 = vadd.xlane.f32.xlu0 %v794
          %v796 = vpop.xlane.xlu0 %795
          %v797 = vpack.c.bf16 %v790, %v788
          %798 = vrot.lane.b32.xlu0 %v565, 72
          %v799 = vpop.permute.xlu0 %798
          %v801 = vsel %vm595, %v797, 0
          %v804 = vsel %vm645, %v799, 0
          %806 = vmatpush.bf16.msra.mxu0 0
          %807 = vmatpush.bf16.msra.mxu0 0
          %808 = vmatpush.bf16.msra.mxu0 0
          %809 = vmatpush.bf16.msra.mxu0 0
          %810 = vmatpush.bf16.msra.mxu0 0
          %811 = vmatpush.bf16.msra.mxu0 0
          %812 = vmatpush.bf16.msra.mxu0 0
          %813 = vmatpush.bf16.msra.mxu0 %v804
          %814 = vmatmul.bf16.gmra.mxu0 %v801
          %v815 = vpop.f32.mrf.mxu0
          %v816 = vadd.f32 0.0, %v815
          %v817 = vpop.f32.mrf.mxu0
          %v818 = vadd.f32 0.0, %v817
          %819 = vdwg.mxu0
          %v820 = vrcp.pop %v793
          %v821 = vrcp.pop %v796
          %v822 = vmul.f32 %v816, %v820
          %v823 = vmul.f32 %v818, %v821
          %825 = vrot.lane.b32.xlu0 %v823, 8
          %v826 = vpop.permute.xlu0 %825
          %v828 = vsel %vm595, %v822, %v826
          %v829 = vpack.c.bf16 %v828, %v828
          %v830 = vld [vmem:[%s4 + $0x8] sm:$0xf]
          %v831 = vld [vmem:[%s4 + $0xc] sm:$0xf]
          %v834 = vunpack.c.l.b16 %v830
          %v835 = vunpack.c.l.b16 %v831
          %v836 = vpack.c.b16 %v835, %v834
          %v839 = vsel %vm681, %v829, 0
          %841 = vmatpush.bf16.msra.mxu0 0
          %842 = vmatpush.bf16.msra.mxu0 0
          %843 = vmatpush.bf16.msra.mxu0 0
          %844 = vmatpush.bf16.msra.mxu0 0
          %845 = vmatpush.bf16.msra.mxu0 0
          %846 = vmatpush.bf16.msra.mxu0 0
          %847 = vmatpush.bf16.msra.mxu0 0
          %848 = vmatpush.bf16.msra.mxu0 %v836
          %849 = vmatmul.bf16.gmra.mxu0 %v839
          %v850 = vpop.f32.mrf.mxu0
          %v851 = vadd.f32 0.0, %v850
          %v852 = vpop.f32.mrf.mxu0
          %853 = vdwg.mxu0
          %v854 = vadd.f32 %v698, %v851
          %855 = vst.msk [vmem:[%s455] sm:$0xff] %vm474, %v854
          %v856 = vld [vmem:[%s6] sm:$0x1]
          %v857 = vmul.f32 %v854, %v854
          %v858 = vsel %vm474, %v857, 0.0
          %859 = vadd.xlane.f32.xlu0 %v858
          %v860 = vpop.xlane.xlu0 %859
          %v861 = vmul.f32 %v860, %v484
          %v862 = vadd.f32 %v861, 1e-05
          %v863 = vrsqrt.pop %v862
          %v864 = vmul.f32 %v863, %v862
          %v865 = vmul.f32 %v864, %v863
          %v866 = vmul.f32 0.5, %v865
          %v867 = vsub.f32 1.5, %v866
          %v868 = vmul.f32 %v863, %v867
          %vm869 = vweird.f32 %v862
          %vm870 = vweird.f32 %v863
          %vm871 = vmor %vm869, %vm870
          %v872 = vsel %vm871, %v863, %v868
          %v873 = vmul.f32 %v854, %v872
          %v875 = vperm.slane %v856, 0
          %v877 = vmul.f32 %v873, %v875
          %v878 = vpack.c.bf16 %v877, %v877
          %vm879 = vcmask 257024
          %880 = vst.msk [vmem:[#allocation2] sm:$0xf] %vm879, %v878
        $region80: #{tpu_custom_call.1} parent=59 // pred_fallthru
          _
        %v881 = vld [vmem:[#allocation2] sm:$0xf]
        %v882 = vld [vmem:[#allocation8] sm:$0xf]
        %v883 = vld [vmem:[#allocation8 + $0x4] sm:$0xf]
        %v884 = vld [vmem:[#allocation8 + $0x8] sm:$0xf]
        %v885 = vld [vmem:[#allocation8 + $0xc] sm:$0xf]
        %v890 = vunpack.c.l.b16 %v882
        %v891 = vunpack.c.l.b16 %v883
        %v892 = vunpack.c.l.b16 %v884
        %v893 = vunpack.c.l.b16 %v885
        %v894 = vpack.c.b16 %v891, %v890
        %v895 = vpack.c.b16 %v893, %v892
        %vm898 = vcmask 261120
        %v900 = vsel %vm898, %v881, 0
        %902 = vmatpush.bf16.msra.mxu0 0
        %903 = vmatpush.bf16.msra.mxu0 0
        %904 = vmatpush.bf16.msra.mxu0 0
        %905 = vmatpush.bf16.msra.mxu0 0
        %906 = vmatpush.bf16.msra.mxu0 0
        %907 = vmatpush.bf16.msra.mxu0 0
        %908 = vmatpush.bf16.msra.mxu0 %v895
        %909 = vmatpush.bf16.msra.mxu0 %v894
        %910 = vmatmul.bf16.gmra.mxu0 %v900
        %v911 = vpop.f32.mrf.mxu0
        %v912 = vadd.f32 0.0, %v911
        %v913 = vpop.f32.mrf.mxu0
        %914 = vdwg.mxu0
        %v915 = vld [vmem:[#allocation9] sm:$0xf]
        %v916 = vld [vmem:[#allocation9 + $0x4] sm:$0xf]
        %v917 = vld [vmem:[#allocation9 + $0x8] sm:$0xf]
        %v918 = vld [vmem:[#allocation9 + $0xc] sm:$0xf]
        %v923 = vunpack.c.l.b16 %v915
        %v924 = vunpack.c.l.b16 %v916
        %v925 = vunpack.c.l.b16 %v917
        %v926 = vunpack.c.l.b16 %v918
        %v927 = vpack.c.b16 %v924, %v923
        %v928 = vpack.c.b16 %v926, %v925
        %931 = vmatpush.bf16.msra.mxu0 0
        %932 = vmatpush.bf16.msra.mxu0 0
        %933 = vmatpush.bf16.msra.mxu0 0
        %934 = vmatpush.bf16.msra.mxu0 0
        %935 = vmatpush.bf16.msra.mxu0 0
        %936 = vmatpush.bf16.msra.mxu0 0
        %937 = vmatpush.bf16.msra.mxu0 %v928
        %938 = vmatpush.bf16.msra.mxu0 %v927
        %939 = vmatmul.bf16.gmra.mxu0 %v900
        %v940 = vpop.f32.mrf.mxu0
        %v941 = vadd.f32 0.0, %v940
        %v942 = vpop.f32.mrf.mxu0
        %943 = vdwg.mxu0
        %v944 = vxor.u32 %v941, 2147483648
        %v945 = vmul.f32 %v944, 1.442695
        %v946 = vpow.pop %v945
        %v947 = vadd.f32 %v946, 1.0
        %v948 = vrcp.pop %v947
        %v949 = vmul.f32 %v947, %v948
        %v950 = vsub.f32 1.0, %v949
        %v951 = vmul.f32 %v948, %v950
        %v952 = vadd.f32 %v948, %v951
        %vm953 = vweird.f32 %v947
        %vm954 = vweird.f32 %v948
        %vm955 = vmor %vm953, %vm954
        %v956 = vsel %vm955, %v948, %v952
        %v957 = vand.u32 2147483647, %v947
        %vm958 = vcmp.eq.f32.partialorder %v957, 8.507059e+37
        %v959 = vand.u32 %v947, 2147483648
        %v960 = vor.u32 1.1754944e-38, %v959
        %v961 = vsel %vm958, %v960, %v956
        %v962 = vmul.f32 1.0, %v961
        %v963 = vmul.f32 %v941, %v962
        %v964 = vmul.f32 %v912, %v963
        %v965 = vpack.c.bf16 %v964, %v964
        %v966 = vld [vmem:[%s455] sm:$0xff]
        %v967 = vld [vmem:[%s464] sm:$0xf]
        %v968 = vld [vmem:[%s464 + $0x4] sm:$0xf]
        %v969 = vld [vmem:[%s464 + $0x8] sm:$0xf]
        %v970 = vld [vmem:[%s464 + $0xc] sm:$0xf]
        %v971 = vld [vmem:[%s464 + $0x10] sm:$0xf]
        %v972 = vld [vmem:[%s464 + $0x14] sm:$0xf]
        %v973 = vld [vmem:[%s464 + $0x18] sm:$0xf]
        %v974 = vld [vmem:[%s464 + $0x1c] sm:$0xf]
        %v983 = vunpack.c.l.b16 %v967
        %v984 = vunpack.c.l.b16 %v968
        %v985 = vunpack.c.l.b16 %v969
        %v986 = vunpack.c.l.b16 %v970
        %v987 = vunpack.c.l.b16 %v971
        %v988 = vunpack.c.l.b16 %v972
        %v989 = vunpack.c.l.b16 %v973
        %v990 = vunpack.c.l.b16 %v974
        %v991 = vpack.c.b16 %v984, %v983
        %v992 = vpack.c.b16 %v986, %v985
        %v993 = vpack.c.b16 %v988, %v987
        %v994 = vpack.c.b16 %v990, %v989
        %vm999 = vcmask 523264
        %v1001 = vsel %vm999, %v965, 0
        %1003 = vmatpush.bf16.msra.mxu0 0
        %1004 = vmatpush.bf16.msra.mxu0 0
        %1005 = vmatpush.bf16.msra.mxu0 0
        %1006 = vmatpush.bf16.msra.mxu0 0
        %1007 = vmatpush.bf16.msra.mxu0 %v994
        %1008 = vmatpush.bf16.msra.mxu0 %v993
        %1009 = vmatpush.bf16.msra.mxu0 %v992
        %1010 = vmatpush.bf16.msra.mxu0 %v991
        %1011 = vmatmul.bf16.gmra.mxu0 %v1001
        %v1012 = vpop.f32.mrf.mxu0
        %v1013 = vadd.f32 0.0, %v1012
        %v1014 = vpop.f32.mrf.mxu0
        %1015 = vdwg.mxu0
        %v1016 = vadd.f32 %v966, %v1013
        %1017 = vst.msk [vmem:[%s455] sm:$0xff] %vm898, %v1016
        %s1018 = sand.u32 %s277, 1
        %s1019 = scalar_lea.sflag [#allocation5], %s1018
        %s1020 = sand.u32 %s277, 1
        %s1021 = smul.addr %s1020, 8
        %s1022 = scalar_lea.vmem [#allocation11], %s1021
        // Predicated region
        $region81: #{tpu_custom_call.1} parent=59 // pred_check
          %p1023 = pneg %p287
        $region82: #{tpu_custom_call.1} parent=59 // pred_check_branch
          %1025 = sbr.rel (%p1023) target = $region84
        $region83: #{tpu_custom_call.1} parent=59 // pred_region
          %1027 = vsyncadd %s1019, 0
          %s1028 = smul.addr %s31, 8
          %s1029 = scalar_lea.hbm %s10, %s1028
          %s1031 = sshll.u32 %s1022, 4
          %s1032 = int_to_ptr.vmem [resolvable:$true] %s1031
          %s1033 = sshll.u32 %s1029, 4
          %s1034 = int_to_ptr.hbm [resolvable:$true] %s1033
          %1036 = dma.vmem_to_hbm [thread:$0]  %s1032, 128, %s1034, %s1019
        $region84: #{tpu_custom_call.1} parent=59 // pred_fallthru
          _
      $region60: #{tpu_custom_call.1} parent=5 // pred_fallthru
        _
      %p1037 = scmp.le.s32.totalorder 2, %s22
      // Predicated region
      $region85: #{tpu_custom_call.1} parent=5 // pred_check
        %p1038 = pneg %p1037
      $region86: #{tpu_custom_call.1} parent=5 // pred_check_branch
        %1040 = sbr.rel (%p1038) target = $region88
      $region87: #{tpu_custom_call.1} parent=5 // pred_region
        %s1041 = ssub.s32 %s22, 2
        // Predicated region
        $region89: #{tpu_custom_call.1} parent=87 // pred_check
          %p1042 = pneg %p293
        $region90: #{tpu_custom_call.1} parent=87 // pred_check_branch
          %1044 = sbr.rel (%p1042) target = $region92
        $region91: #{tpu_custom_call.1} parent=87 // pred_region
          %s1045 = sand.u32 %s278, 1
          %s1046 = scalar_lea.sflag [#allocation5], %s1045
          %s1047 = sand.u32 %s278, 1
          %s1048 = smul.addr %s1047, 8
          %s1049 = scalar_lea.vmem [#allocation11], %s1048
          %1051 = dma.done %s1046, 128
        $region92: #{tpu_custom_call.1} parent=87 // pred_fallthru
          _
      $region88: #{tpu_custom_call.1} parent=5 // pred_fallthru
        _
    $region6: #{tpu_custom_call.1} parent=1 // loop_footer
      %s26 = sadd.s32 1, %s22
    $region7: #{tpu_custom_call.1} parent=1 // loop_footer_branch
      %21 = sbr.rel target = $region3
    $region8: #{tpu_custom_call.1} parent=1 // loop_exit
      _
    %1052 = vsyncpa [#allocation4], 1
    %s1053 = scalar_lea.sflag [#allocation4], 1
    %1054 = vsyncpa %s1053, 1
    %1055 = vsyncpa [#allocation7], 1
    %1056 = vsyncpa [#allocation10], 1
    %1057 = vsyncpa [#allocation5], 1
    %s1058 = scalar_lea.sflag [#allocation5], 1
    %1059 = vsyncpa %s1058, 1

</llo_original>
